<compile_context>
chip_gen: v6e
topology: v6e:2x2x1
jax: 0.10.0
libtpu: 0.0.40
codegen_flags: <defaults>
</compile_context>

<pallas_src>
import functools

import jax
import jax.numpy as jnp
from jax.experimental import pallas as pl
from jax.experimental.pallas import tpu as pltpu


# ----------------------------------------------------------------------------
# Fused forward kernel (single grid-less pallas_call, everything VMEM-resident)
# ----------------------------------------------------------------------------
def _fused_forward_kernel(
    bert_ref,      # (B, 768)        f32  BERT [CLS] features
    vgg_ref,       # (B, 1000)       f32  VGG19 classifier output
    w_enc_ref,     # (768 + 1000, H) bf16 [text_enc_fc2 ; vis_enc_fc1] (te_bn folded)
    w_h_ref,       # (9H, 2H)        bf16 hidden-weight slab (layout in init_params)
    bias_ref,      # (10, 2H)        f32  bias slab + att.u weight row
    pred_ref,      # (B, C)          f32
    loss_ref,      # (2,)            f32  SMEM: [diff_loss, mmd_loss]
    *, hidden, num_class, kernel_mul, kernel_num,
):
    f32, bf16 = jnp.float32, jnp.bfloat16
    H, C = hidden, num_class
    B = bert_ref.shape[0]
    k_text = bert_ref.shape[1]
    k_img = vgg_ref.shape[1]

    # -------- bias slab rows (f32, consumed on the VPU) -----------------------
    b_te  = bias_ref[0:1, 0:H]
    b_vis = bias_ref[1:2, 0:H]
    b_zt  = bias_ref[2:3, 0:2 * H]
    b_zv  = bias_ref[3:4, 0:2 * H]
    b_sh  = bias_ref[4:5, 0:H]
    b_aw  = bias_ref[5:6, 0:H]
    b_au  = bias_ref[6:7, 0:1]
    b_f1  = bias_ref[7:8, 0:H]
    b_f2  = bias_ref[8:9, 0:C]
    w_au  = bias_ref[9:10, 0:H]      # att.u weight as f32 row (VPU reduce, no MXU)

    # -------- encoders (bf16 operands on MXU, f32 accumulate) -----------------
    text_feat = jnp.maximum(
        jnp.dot(bert_ref[...].astype(bf16), w_enc_ref[0:k_text, :],
                preferred_element_type=f32) + b_te, 0.0)                        # (B, H)
    image_feat = jnp.maximum(
        jnp.dot(vgg_ref[...].astype(bf16), w_enc_ref[k_text:k_text + k_img, :],
                preferred_element_type=f32) + b_vis, 0.0)                       # (B, H)

    # -------- shared/private zoom: one (H, 2H) matmul per modality ------------
    zt = jnp.dot(text_feat.astype(bf16), w_h_ref[0:H, :],
                 preferred_element_type=f32) + b_zt                             # (B, 2H)
    zv = jnp.dot(image_feat.astype(bf16), w_h_ref[H:2 * H, :],
                 preferred_element_type=f32) + b_zv                             # (B, 2H)
    shared_t, private_t = zt[:, 0:H], zt[:, H:2 * H]
    shared_v, private_v = zv[:, 0:H], zv[:, H:2 * H]

    # -------- shared_linear on lane-concat [shared_t | shared_v] --------------
    sh_in = jnp.concatenate([shared_t, shared_v], axis=1)                       # (B, 2H)
    shared_vec = jnp.dot(sh_in.astype(bf16), w_h_ref[2 * H:4 * H, 0:H],
                         preferred_element_type=f32) + b_sh                     # (B, H)

    # -------- fusion_model: SelfAttention over 3 components (batched) ---------
    stacked = jnp.concatenate([shared_vec, private_t, private_v], axis=0)       # (3B, H)
    u = jnp.tanh(jnp.dot(stacked.astype(bf16), w_h_ref[4 * H:5 * H, 0:H],
                         preferred_element_type=f32) + b_aw)                    # (3B, H)
    scores = jnp.sum(u * w_au, axis=1, keepdims=True) + b_au                    # (3B, 1)
    s0, s1, s2 = scores[0:B], scores[B:2 * B], scores[2 * B:3 * B]              # (B, 1)
    m = jnp.maximum(jnp.maximum(s0, s1), s2)
    e0, e1, e2 = jnp.exp(s0 - m), jnp.exp(s1 - m), jnp.exp(s2 - m)
    inv_den = pl.reciprocal(e0 + e1 + e2, approx=True)
    attn = jnp.concatenate([(e0 * inv_den) * shared_vec,
                            (e1 * inv_den) * private_t,
                            (e2 * inv_den) * private_v], axis=1)                # (B, 3H)

    hmid = jnp.maximum(
        jnp.dot(attn.astype(bf16), w_h_ref[5 * H:8 * H, 0:H],
                preferred_element_type=f32) + b_f1, 0.0)                        # (B, H)
    logits = jnp.dot(hmid.astype(bf16), w_h_ref[8 * H:9 * H, 0:C],
                     preferred_element_type=f32) + b_f2                         # (B, C)
    logits = logits - jnp.max(logits, axis=-1, keepdims=True)
    ez = jnp.exp(logits)
    pred_ref[...] = (ez * pl.reciprocal(jnp.sum(ez, axis=-1, keepdims=True),
                                        approx=True)).astype(pred_ref.dtype)

    # -------- DiffLoss: one (3H x 3H) Gram of [sv_n | pt_n | pv_n] ------------
    def _center_norm(x):
        x = x - jnp.mean(x, axis=0, keepdims=True)
        nrm = jnp.sqrt(jnp.sum(x * x, axis=1, keepdims=True))
        return x / (nrm + 1e-6)

    xn = jnp.concatenate([_center_norm(shared_vec), _center_norm(private_t),
                          _center_norm(private_v)], axis=1)                     # (B, 3H)
    g = jax.lax.dot_general(xn, xn, (((0,), (0,)), ((), ())),
                            preferred_element_type=f32)                         # (3H, 3H)
    g2 = g * g
    loss_ref[0] = (jnp.mean(g2[H:2 * H, 0:H])            # private_t vs shared_vec
                   + jnp.mean(g2[2 * H:3 * H, 0:H])      # private_v vs shared_vec
                   + jnp.mean(g2[2 * H:3 * H, H:2 * H])  # private_v vs private_t
                   ) / 3.0

    # -------- MMD (multi-kernel RBF): one (2B x 2B) Gram -----------------------
    n2 = 2 * B
    xs = jnp.concatenate([shared_t, shared_v], axis=0)                          # (2B, H)
    gram = jax.lax.dot_general(xs, xs, (((1,), (1,)), ((), ())),
                               preferred_element_type=f32)                      # (2B, 2B)
    eye = (jax.lax.broadcasted_iota(jnp.int32, (n2, n2), 0)
           == jax.lax.broadcasted_iota(jnp.int32, (n2, n2), 1))
    diag = jnp.where(eye, gram, 0.0)                 # row squared norms on the diagonal
    r_col = jnp.sum(diag, axis=1, keepdims=True)                                # (2B, 1)
    r_row = jnp.sum(diag, axis=0, keepdims=True)                                # (1, 2B)
    l2 = jnp.maximum(r_col + r_row - 2.0 * gram, 0.0)

    bandwidth = jnp.sum(l2) / float(n2 * n2 - n2)     # full-matrix sum (diag is 0)
    bandwidth = bandwidth / (kernel_mul ** (kernel_num // 2))
    kmat = jnp.zeros_like(l2)
    for i in range(kernel_num):
        kmat = kmat + jnp.exp(-l2 / (bandwidth * (kernel_mul ** i)))
    loss_ref[1] = (jnp.sum(kmat[0:B, 0:B]) + jnp.sum(kmat[B:, B:])
                   - jnp.sum(kmat[0:B, B:]) - jnp.sum(kmat[B:, 0:B])) / float(B * B)


# ----------------------------------------------------------------------------
# Wrapper: one pallas_call, 5 operands (bert, vgg, 3 packed slabs)
# ----------------------------------------------------------------------------
def pallas_text_concat_vision(params, bert_cls, vgg_feat, *,
                              hidden, num_class, kernel_mul=2.0, kernel_num=5):
    B = bert_cls.shape[0]
    vmem = pl.BlockSpec(memory_space=pltpu.MemorySpace.VMEM)
    smem = pl.BlockSpec(memory_space=pltpu.MemorySpace.SMEM)
    pred, losses = pl.pallas_call(
        functools.partial(_fused_forward_kernel, hidden=hidden, num_class=num_class,
                          kernel_mul=float(kernel_mul), kernel_num=int(kernel_num)),
        out_shape=(jax.ShapeDtypeStruct((B, num_class), jnp.float32),
                   jax.ShapeDtypeStruct((2,), jnp.float32)),
        in_specs=[vmem] * 5,
        out_specs=(vmem, smem),
    )(bert_cls, vgg_feat, params["w_enc"], params["w_h"], params["bias"])
    return pred, losses[0], losses[1]


# ----------------------------------------------------------------------------
# Parameter setup: torch-default init, BN folding, then pack into 3 slabs
# ----------------------------------------------------------------------------
def init_linear(key, fan_in, fan_out):
    kw, kb = jax.random.split(key)
    bound = 1.0 / float(fan_in) ** 0.5
    w = jax.random.uniform(kw, (fan_in, fan_out), jnp.float32, -bound, bound)
    b = jax.random.uniform(kb, (1, fan_out), jnp.float32, -bound, bound)
    return w, b


def bn_init(dim):
    # (gamma, beta, running_mean, running_var) at nn.BatchNorm1d initialization.
    return (jnp.ones((dim,), jnp.float32), jnp.zeros((dim,), jnp.float32),
            jnp.zeros((dim,), jnp.float32), jnp.ones((dim,), jnp.float32))


def fold_bn_pre(w, b, bn, eps=1e-5):
    """y = BN(x) @ w + b  ->  y = x @ w' + b'   (eval BN on the linear's input)."""
    gamma, beta, mean, var = bn
    s = gamma / jnp.sqrt(var + eps)
    w2 = w * s[:, None]
    b2 = b + ((beta - mean * s)[None, :] @ w)
    return w2, b2


def fold_bn_post(w, b, bn, eps=1e-5):
    """y = BN(x @ w + b)  ->  y = x @ w' + b'   (eval BN on the linear's output)."""
    gamma, beta, mean, var = bn
    s = gamma / jnp.sqrt(var + eps)
    w2 = w * s[None, :]
    b2 = (b - mean[None, :]) * s[None, :] + beta[None, :]
    return w2, b2


def init_params(key, mp):
    keys = jax.random.split(key, 11)
    H = mp["shared_zoom_hidden_size"]
    FH = mp["fusion_hidden_size"]
    C = mp["num_class"]
    assert H == FH == mp["text_fc_out"] == mp["img_fc_out"], "kernel assumes one hidden size"
    assert C <= 2 * H

    te_fc = init_linear(keys[0], 768, mp["text_fc_out"])          # TextEncoder.text_enc_fc2
    vis_fc = init_linear(keys[1], 1000, mp["img_fc_out"])         # VisionEncoder.vis_enc_fc1
    shared_t_l = init_linear(keys[2], H, H)
    shared_v_l = init_linear(keys[3], H, H)
    private_t_l = init_linear(keys[4], H, H)
    private_v_l = init_linear(keys[5], H, H)
    shared_linear = init_linear(keys[6], FH * 2, FH)
    att_W = init_linear(keys[7], FH, FH)                          # fusion_model.att.W
    att_u = init_linear(keys[8], FH, 1)                           # fusion_model.att.u
    fusion_l1 = init_linear(keys[9], H * 3, FH)
    fusion_l2 = init_linear(keys[10], FH, C)

    te_bn = bn_init(768)
    zoom_shared_bn = bn_init(H)
    zoom_private_bn = bn_init(H)
    fusion_bn = bn_init(H * 3)

    # Fold eval-mode BatchNorm into adjacent linears.
    w_te, b_te = fold_bn_pre(*te_fc, te_bn)
    w_st, b_st = fold_bn_post(*shared_t_l, zoom_shared_bn)
    w_sv, b_sv = fold_bn_post(*shared_v_l, zoom_shared_bn)
    w_pt, b_pt = fold_bn_post(*private_t_l, zoom_private_bn)
    w_pv, b_pv = fold_bn_post(*private_v_l, zoom_private_bn)
    w_f1, b_f1 = fold_bn_pre(*fusion_l1, fusion_bn)

    # Concatenate same-LHS zoom weights along N: [shared | private].
    w_zt = jnp.concatenate([w_st, w_pt], axis=1)                  # (H, 2H)
    b_zt = jnp.concatenate([b_st, b_pt], axis=1)
    w_zv = jnp.concatenate([w_sv, w_pv], axis=1)
    b_zv = jnp.concatenate([b_sv, b_pv], axis=1)

    W2 = 2 * H

    def _cols(x):
        return jnp.pad(x, ((0, 0), (0, W2 - x.shape[1])))

    # Slab 1: encoder weights, bf16, stacked along K (768 text rows, 1000 image rows).
    w_enc = jnp.concatenate([w_te, vis_fc[0]], axis=0).astype(jnp.bfloat16)

    # Slab 2: hidden weights, bf16, (9H, 2H); row layout matches kernel slices:
    #   [0,  H): w_zt (H,2H)   [H, 2H): w_zv (H,2H)   [2H,4H): shared_linear (2H,H)
    #   [4H,5H): att.W (H,H)   [5H,8H): fusion_l1 (3H,H)   [8H,9H): fusion_l2 (H,C)
    w_h = jnp.concatenate([
        w_zt, w_zv,
        _cols(shared_linear[0]),
        _cols(att_W[0]),
        _cols(w_f1),
        _cols(fusion_l2[0]),
    ], axis=0).astype(jnp.bfloat16)

    # Slab 3: biases + att.u weight row, f32, (10, 2H); one logical row each.
    bias = jnp.concatenate([
        _cols(b_te),              # 0: text_enc_fc2 bias
        _cols(vis_fc[1]),         # 1: vis_enc_fc1 bias
        b_zt,                     # 2: zoom text bias (2H)
        b_zv,                     # 3: zoom image bias (2H)
        _cols(shared_linear[1]),  # 4: shared_linear bias
        _cols(att_W[1]),          # 5: att.W bias
        _cols(att_u[1]),          # 6: att.u bias (scalar at col 0)
        _cols(b_f1),              # 7: fusion linear_1 bias
        _cols(fusion_l2[1]),      # 8: fusion linear_2 bias
        _cols(att_u[0].T),        # 9: att.u weight as (1, H) row (VPU reduce)
    ], axis=0).astype(jnp.float32)

    return {"w_enc": w_enc, "w_h": w_h, "bias": bias}


# ----------------------------------------------------------------------------
if __name__ == "__main__":
    model_params = dict(
        text_fc_out=32,
        img_fc_out=32,
        fusion_hidden_size=32,
        num_class=2,
        shared_zoom_hidden_size=32,
        private_zoom_hidden_size=32,
        dropout_p=0.4,            # unused: eval-mode dropout is identity
        data_type="weibo",
    )

    key = jax.random.PRNGKey(0)
    kparams, ktext, kimg = jax.random.split(key, 3)
    params = init_params(kparams, model_params)

    B = 2
    # TODO(synk): pretrained bert-base-chinese and torchvision VGG19 backbones have no
    # in-script Pallas equivalent; their feature outputs are the kernel inputs.
    bert_cls = jax.random.normal(ktext, (B, 768), jnp.float32)    # BERT [CLS] features
    vgg_feat = jax.random.normal(kimg, (B, 1000), jnp.float32)    # VGG19 classifier output

    fwd = jax.jit(functools.partial(
        pallas_text_concat_vision,
        hidden=model_params["shared_zoom_hidden_size"],
        num_class=model_params["num_class"]))
    prediction, diff_loss, shared_loss = fwd(params, bert_cls, vgg_feat)
    jax.block_until_ready((prediction, diff_loss, shared_loss))

    assert prediction.shape == (B, model_params["num_class"])
    assert diff_loss.shape == () and shared_loss.shape == ()
    assert bool(jnp.all(jnp.isfinite(prediction)))
    print("KERNEL_OK")
</pallas_src>

<mosaic_0001>
module attributes {stable_mosaic.version = 11 : i64} {
  func.func @_fused_forward_kernel(%arg0: memref<2x768xf32, #tpu.memory_space<vmem>>, %arg1: memref<2x1000xf32, #tpu.memory_space<vmem>>, %arg2: memref<1768x32xbf16, #tpu.memory_space<vmem>>, %arg3: memref<288x64xbf16, #tpu.memory_space<vmem>>, %arg4: memref<10x64xf32, #tpu.memory_space<vmem>>, %arg5: memref<2x2xf32, #tpu.memory_space<vmem>>, %arg6: memref<2xf32, #tpu.memory_space<smem>>) attributes {dimension_semantics = [], scalar_prefetch = 0 : i64, scratch_operands = 0 : i64, tpu.core_type = #tpu.core_type<tc>} {
    %c0 = arith.constant 0 : index
    %c0_0 = arith.constant 0 : index
    %0 = vector.load %arg4[%c0, %c0_0] : memref<10x64xf32, #tpu.memory_space<vmem>>, vector<1x32xf32>
    %c1 = arith.constant 1 : index
    %c0_1 = arith.constant 0 : index
    %1 = vector.load %arg4[%c1, %c0_1] : memref<10x64xf32, #tpu.memory_space<vmem>>, vector<1x32xf32>
    %c2 = arith.constant 2 : index
    %c0_2 = arith.constant 0 : index
    %2 = vector.load %arg4[%c2, %c0_2] : memref<10x64xf32, #tpu.memory_space<vmem>>, vector<1x64xf32>
    %c3 = arith.constant 3 : index
    %c0_3 = arith.constant 0 : index
    %3 = vector.load %arg4[%c3, %c0_3] : memref<10x64xf32, #tpu.memory_space<vmem>>, vector<1x64xf32>
    %c4 = arith.constant 4 : index
    %c0_4 = arith.constant 0 : index
    %4 = vector.load %arg4[%c4, %c0_4] : memref<10x64xf32, #tpu.memory_space<vmem>>, vector<1x32xf32>
    %c5 = arith.constant 5 : index
    %c0_5 = arith.constant 0 : index
    %5 = vector.load %arg4[%c5, %c0_5] : memref<10x64xf32, #tpu.memory_space<vmem>>, vector<1x32xf32>
    %c6 = arith.constant 6 : index
    %c0_6 = arith.constant 0 : index
    %6 = vector.load %arg4[%c6, %c0_6] : memref<10x64xf32, #tpu.memory_space<vmem>>, vector<1x1xf32>
    %c7 = arith.constant 7 : index
    %c0_7 = arith.constant 0 : index
    %7 = vector.load %arg4[%c7, %c0_7] : memref<10x64xf32, #tpu.memory_space<vmem>>, vector<1x32xf32>
    %c8 = arith.constant 8 : index
    %c0_8 = arith.constant 0 : index
    %8 = vector.load %arg4[%c8, %c0_8] : memref<10x64xf32, #tpu.memory_space<vmem>>, vector<1x2xf32>
    %c9 = arith.constant 9 : index
    %c0_9 = arith.constant 0 : index
    %9 = vector.load %arg4[%c9, %c0_9] : memref<10x64xf32, #tpu.memory_space<vmem>>, vector<1x32xf32>
    %c0_10 = arith.constant 0 : index
    %c0_11 = arith.constant 0 : index
    %10 = vector.load %arg0[%c0_10, %c0_11] : memref<2x768xf32, #tpu.memory_space<vmem>>, vector<2x768xf32>
    %11 = arith.truncf %10 : vector<2x768xf32> to vector<2x768xbf16>
    %c0_12 = arith.constant 0 : index
    %c0_13 = arith.constant 0 : index
    %12 = vector.load %arg2[%c0_12, %c0_13] : memref<1768x32xbf16, #tpu.memory_space<vmem>>, vector<768x32xbf16>
    %cst = arith.constant dense<0.000000e+00> : vector<2x32xf32>
    %13 = tpu.matmul %11, %12, %cst {dimension_numbers = #tpu.dot_dimension_numbers<[1], [0], [0], [1], [0, 0, 1, 1], [], []>} : vector<2x768xbf16>, vector<768x32xbf16>, vector<2x32xf32> -> vector<2x32xf32>
    %14 = vector.broadcast %0 : vector<1x32xf32> to vector<2x32xf32>
    %15 = arith.addf %13, %14 : vector<2x32xf32>
    %cst_14 = arith.constant 0.000000e+00 : f32
    %16 = vector.broadcast %cst_14 : f32 to vector<2x32xf32>
    %17 = arith.maximumf %15, %16 : vector<2x32xf32>
    %c0_15 = arith.constant 0 : index
    %c0_16 = arith.constant 0 : index
    %18 = vector.load %arg1[%c0_15, %c0_16] : memref<2x1000xf32, #tpu.memory_space<vmem>>, vector<2x1000xf32>
    %19 = arith.truncf %18 : vector<2x1000xf32> to vector<2x1000xbf16>
    %c768 = arith.constant 768 : index
    %c0_17 = arith.constant 0 : index
    %20 = vector.load %arg2[%c768, %c0_17] : memref<1768x32xbf16, #tpu.memory_space<vmem>>, vector<1000x32xbf16>
    %cst_18 = arith.constant dense<0.000000e+00> : vector<2x32xf32>
    %21 = tpu.matmul %19, %20, %cst_18 {dimension_numbers = #tpu.dot_dimension_numbers<[1], [0], [0], [1], [0, 0, 1, 1], [], []>} : vector<2x1000xbf16>, vector<1000x32xbf16>, vector<2x32xf32> -> vector<2x32xf32>
    %22 = vector.broadcast %1 : vector<1x32xf32> to vector<2x32xf32>
    %23 = arith.addf %21, %22 : vector<2x32xf32>
    %cst_19 = arith.constant 0.000000e+00 : f32
    %24 = vector.broadcast %cst_19 : f32 to vector<2x32xf32>
    %25 = arith.maximumf %23, %24 : vector<2x32xf32>
    %26 = arith.truncf %17 : vector<2x32xf32> to vector<2x32xbf16>
    %c0_20 = arith.constant 0 : index
    %c0_21 = arith.constant 0 : index
    %27 = vector.load %arg3[%c0_20, %c0_21] : memref<288x64xbf16, #tpu.memory_space<vmem>>, vector<32x64xbf16>
    %cst_22 = arith.constant dense<0.000000e+00> : vector<2x64xf32>
    %28 = tpu.matmul %26, %27, %cst_22 {dimension_numbers = #tpu.dot_dimension_numbers<[1], [0], [0], [1], [0, 0, 1, 1], [], []>} : vector<2x32xbf16>, vector<32x64xbf16>, vector<2x64xf32> -> vector<2x64xf32>
    %29 = vector.broadcast %2 : vector<1x64xf32> to vector<2x64xf32>
    %30 = arith.addf %28, %29 : vector<2x64xf32>
    %31 = arith.truncf %25 : vector<2x32xf32> to vector<2x32xbf16>
    %c32 = arith.constant 32 : index
    %c0_23 = arith.constant 0 : index
    %32 = vector.load %arg3[%c32, %c0_23] : memref<288x64xbf16, #tpu.memory_space<vmem>>, vector<32x64xbf16>
    %cst_24 = arith.constant dense<0.000000e+00> : vector<2x64xf32>
    %33 = tpu.matmul %31, %32, %cst_24 {dimension_numbers = #tpu.dot_dimension_numbers<[1], [0], [0], [1], [0, 0, 1, 1], [], []>} : vector<2x32xbf16>, vector<32x64xbf16>, vector<2x64xf32> -> vector<2x64xf32>
    %34 = vector.broadcast %3 : vector<1x64xf32> to vector<2x64xf32>
    %35 = arith.addf %33, %34 : vector<2x64xf32>
    %36 = vector.extract_strided_slice %30 {offsets = [0, 0], sizes = [2, 32], strides = [1, 1]} : vector<2x64xf32> to vector<2x32xf32>
    %37 = vector.extract_strided_slice %30 {offsets = [0, 32], sizes = [2, 32], strides = [1, 1]} : vector<2x64xf32> to vector<2x32xf32>
    %38 = vector.extract_strided_slice %35 {offsets = [0, 0], sizes = [2, 32], strides = [1, 1]} : vector<2x64xf32> to vector<2x32xf32>
    %39 = vector.extract_strided_slice %35 {offsets = [0, 32], sizes = [2, 32], strides = [1, 1]} : vector<2x64xf32> to vector<2x32xf32>
    %40 = tpu.concatenate %36, %38 in 1 : vector<2x32xf32>, vector<2x32xf32> -> vector<2x64xf32>
    %41 = arith.truncf %40 : vector<2x64xf32> to vector<2x64xbf16>
    %c64 = arith.constant 64 : index
    %c0_25 = arith.constant 0 : index
    %42 = vector.load %arg3[%c64, %c0_25] : memref<288x64xbf16, #tpu.memory_space<vmem>>, vector<64x32xbf16>
    %cst_26 = arith.constant dense<0.000000e+00> : vector<2x32xf32>
    %43 = tpu.matmul %41, %42, %cst_26 {dimension_numbers = #tpu.dot_dimension_numbers<[1], [0], [0], [1], [0, 0, 1, 1], [], []>} : vector<2x64xbf16>, vector<64x32xbf16>, vector<2x32xf32> -> vector<2x32xf32>
    %44 = vector.broadcast %4 : vector<1x32xf32> to vector<2x32xf32>
    %45 = arith.addf %43, %44 : vector<2x32xf32>
    %46 = tpu.concatenate %45, %37, %39 in 0 : vector<2x32xf32>, vector<2x32xf32>, vector<2x32xf32> -> vector<6x32xf32>
    %47 = arith.truncf %46 : vector<6x32xf32> to vector<6x32xbf16>
    %c128 = arith.constant 128 : index
    %c0_27 = arith.constant 0 : index
    %48 = vector.load %arg3[%c128, %c0_27] : memref<288x64xbf16, #tpu.memory_space<vmem>>, vector<32x32xbf16>
    %cst_28 = arith.constant dense<0.000000e+00> : vector<6x32xf32>
    %49 = tpu.matmul %47, %48, %cst_28 {dimension_numbers = #tpu.dot_dimension_numbers<[1], [0], [0], [1], [0, 0, 1, 1], [], []>} : vector<6x32xbf16>, vector<32x32xbf16>, vector<6x32xf32> -> vector<6x32xf32>
    %50 = vector.broadcast %5 : vector<1x32xf32> to vector<6x32xf32>
    %51 = arith.addf %49, %50 : vector<6x32xf32>
    %52 = math.tanh %51 : vector<6x32xf32>
    %53 = vector.broadcast %9 : vector<1x32xf32> to vector<6x32xf32>
    %54 = arith.mulf %52, %53 : vector<6x32xf32>
    %cst_29 = arith.constant dense<0.000000e+00> : vector<6xf32>
    %55 = vector.multi_reduction <add>, %54, %cst_29 [1] : vector<6x32xf32> to vector<6xf32>
    %56 = vector.shape_cast %55 : vector<6xf32> to vector<6x1xf32>
    %57 = vector.broadcast %6 : vector<1x1xf32> to vector<6x1xf32>
    %58 = arith.addf %56, %57 : vector<6x1xf32>
    %59 = vector.extract_strided_slice %58 {offsets = [0, 0], sizes = [2, 1], strides = [1, 1]} : vector<6x1xf32> to vector<2x1xf32>
    %60 = vector.extract_strided_slice %58 {offsets = [2, 0], sizes = [2, 1], strides = [1, 1]} : vector<6x1xf32> to vector<2x1xf32>
    %61 = vector.extract_strided_slice %58 {offsets = [4, 0], sizes = [2, 1], strides = [1, 1]} : vector<6x1xf32> to vector<2x1xf32>
    %62 = arith.maximumf %59, %60 : vector<2x1xf32>
    %63 = arith.maximumf %62, %61 : vector<2x1xf32>
    %64 = arith.subf %59, %63 : vector<2x1xf32>
    %65 = math.exp %64 : vector<2x1xf32>
    %66 = arith.subf %60, %63 : vector<2x1xf32>
    %67 = math.exp %66 : vector<2x1xf32>
    %68 = arith.subf %61, %63 : vector<2x1xf32>
    %69 = math.exp %68 : vector<2x1xf32>
    %70 = arith.addf %65, %67 : vector<2x1xf32>
    %71 = arith.addf %70, %69 : vector<2x1xf32>
    %72 = tpu.reciprocal %71 {approx = true} : vector<2x1xf32> -> vector<2x1xf32>
    %73 = arith.mulf %65, %72 : vector<2x1xf32>
    %74 = vector.broadcast %73 : vector<2x1xf32> to vector<2x32xf32>
    %75 = arith.mulf %74, %45 : vector<2x32xf32>
    %76 = arith.mulf %67, %72 : vector<2x1xf32>
    %77 = vector.broadcast %76 : vector<2x1xf32> to vector<2x32xf32>
    %78 = arith.mulf %77, %37 : vector<2x32xf32>
    %79 = arith.mulf %69, %72 : vector<2x1xf32>
    %80 = vector.broadcast %79 : vector<2x1xf32> to vector<2x32xf32>
    %81 = arith.mulf %80, %39 : vector<2x32xf32>
    %82 = tpu.concatenate %75, %78, %81 in 1 : vector<2x32xf32>, vector<2x32xf32>, vector<2x32xf32> -> vector<2x96xf32>
    %83 = arith.truncf %82 : vector<2x96xf32> to vector<2x96xbf16>
    %c160 = arith.constant 160 : index
    %c0_30 = arith.constant 0 : index
    %84 = vector.load %arg3[%c160, %c0_30] : memref<288x64xbf16, #tpu.memory_space<vmem>>, vector<96x32xbf16>
    %cst_31 = arith.constant dense<0.000000e+00> : vector<2x32xf32>
    %85 = tpu.matmul %83, %84, %cst_31 {dimension_numbers = #tpu.dot_dimension_numbers<[1], [0], [0], [1], [0, 0, 1, 1], [], []>} : vector<2x96xbf16>, vector<96x32xbf16>, vector<2x32xf32> -> vector<2x32xf32>
    %86 = vector.broadcast %7 : vector<1x32xf32> to vector<2x32xf32>
    %87 = arith.addf %85, %86 : vector<2x32xf32>
    %cst_32 = arith.constant 0.000000e+00 : f32
    %88 = vector.broadcast %cst_32 : f32 to vector<2x32xf32>
    %89 = arith.maximumf %87, %88 : vector<2x32xf32>
    %90 = arith.truncf %89 : vector<2x32xf32> to vector<2x32xbf16>
    %c256 = arith.constant 256 : index
    %c0_33 = arith.constant 0 : index
    %91 = vector.load %arg3[%c256, %c0_33] : memref<288x64xbf16, #tpu.memory_space<vmem>>, vector<32x2xbf16>
    %cst_34 = arith.constant dense<0.000000e+00> : vector<2x2xf32>
    %92 = tpu.matmul %90, %91, %cst_34 {dimension_numbers = #tpu.dot_dimension_numbers<[1], [0], [0], [1], [0, 0, 1, 1], [], []>} : vector<2x32xbf16>, vector<32x2xbf16>, vector<2x2xf32> -> vector<2x2xf32>
    %93 = vector.broadcast %8 : vector<1x2xf32> to vector<2x2xf32>
    %94 = arith.addf %92, %93 : vector<2x2xf32>
    %cst_35 = arith.constant dense<0xFF800000> : vector<2xf32>
    %95 = vector.multi_reduction <maximumf>, %94, %cst_35 [1] : vector<2x2xf32> to vector<2xf32>
    %96 = vector.shape_cast %95 : vector<2xf32> to vector<2x1xf32>
    %97 = vector.broadcast %96 : vector<2x1xf32> to vector<2x2xf32>
    %98 = arith.subf %94, %97 : vector<2x2xf32>
    %99 = math.exp %98 : vector<2x2xf32>
    %cst_36 = arith.constant dense<0.000000e+00> : vector<2xf32>
    %100 = vector.multi_reduction <add>, %99, %cst_36 [1] : vector<2x2xf32> to vector<2xf32>
    %101 = vector.shape_cast %100 : vector<2xf32> to vector<2x1xf32>
    %102 = tpu.reciprocal %101 {approx = true} : vector<2x1xf32> -> vector<2x1xf32>
    %103 = vector.broadcast %102 : vector<2x1xf32> to vector<2x2xf32>
    %104 = arith.mulf %99, %103 : vector<2x2xf32>
    %c0_37 = arith.constant 0 : index
    %c0_38 = arith.constant 0 : index
    %105 = vector.load %arg5[%c0_37, %c0_38] : memref<2x2xf32, #tpu.memory_space<vmem>>, vector<2x2xf32>
    tpu.vector_store %arg5[%c0_37, %c0_38], %104 {strides = array<i32>} : memref<2x2xf32, #tpu.memory_space<vmem>>, vector<2x2xf32>,
    %cst_39 = arith.constant dense<0.000000e+00> : vector<32xf32>
    %106 = vector.multi_reduction <add>, %45, %cst_39 [0] : vector<2x32xf32> to vector<32xf32>
    %107 = vector.shape_cast %106 : vector<32xf32> to vector<1x32xf32>
    %cst_40 = arith.constant 2.000000e+00 : f32
    %108 = vector.broadcast %cst_40 : f32 to vector<1x32xf32>
    %109 = arith.divf %107, %108 : vector<1x32xf32>
    %110 = vector.broadcast %109 : vector<1x32xf32> to vector<2x32xf32>
    %111 = arith.subf %45, %110 : vector<2x32xf32>
    %112 = arith.mulf %111, %111 : vector<2x32xf32>
    %cst_41 = arith.constant dense<0.000000e+00> : vector<2xf32>
    %113 = vector.multi_reduction <add>, %112, %cst_41 [1] : vector<2x32xf32> to vector<2xf32>
    %114 = vector.shape_cast %113 : vector<2xf32> to vector<2x1xf32>
    %115 = math.sqrt %114 : vector<2x1xf32>
    %cst_42 = arith.constant 9.99999997E-7 : f32
    %116 = vector.broadcast %cst_42 : f32 to vector<2x1xf32>
    %117 = arith.addf %115, %116 : vector<2x1xf32>
    %118 = vector.broadcast %117 : vector<2x1xf32> to vector<2x32xf32>
    %119 = arith.divf %111, %118 : vector<2x32xf32>
    %cst_43 = arith.constant dense<0.000000e+00> : vector<32xf32>
    %120 = vector.multi_reduction <add>, %37, %cst_43 [0] : vector<2x32xf32> to vector<32xf32>
    %121 = vector.shape_cast %120 : vector<32xf32> to vector<1x32xf32>
    %cst_44 = arith.constant 2.000000e+00 : f32
    %122 = vector.broadcast %cst_44 : f32 to vector<1x32xf32>
    %123 = arith.divf %121, %122 : vector<1x32xf32>
    %124 = vector.broadcast %123 : vector<1x32xf32> to vector<2x32xf32>
    %125 = arith.subf %37, %124 : vector<2x32xf32>
    %126 = arith.mulf %125, %125 : vector<2x32xf32>
    %cst_45 = arith.constant dense<0.000000e+00> : vector<2xf32>
    %127 = vector.multi_reduction <add>, %126, %cst_45 [1] : vector<2x32xf32> to vector<2xf32>
    %128 = vector.shape_cast %127 : vector<2xf32> to vector<2x1xf32>
    %129 = math.sqrt %128 : vector<2x1xf32>
    %cst_46 = arith.constant 9.99999997E-7 : f32
    %130 = vector.broadcast %cst_46 : f32 to vector<2x1xf32>
    %131 = arith.addf %129, %130 : vector<2x1xf32>
    %132 = vector.broadcast %131 : vector<2x1xf32> to vector<2x32xf32>
    %133 = arith.divf %125, %132 : vector<2x32xf32>
    %cst_47 = arith.constant dense<0.000000e+00> : vector<32xf32>
    %134 = vector.multi_reduction <add>, %39, %cst_47 [0] : vector<2x32xf32> to vector<32xf32>
    %135 = vector.shape_cast %134 : vector<32xf32> to vector<1x32xf32>
    %cst_48 = arith.constant 2.000000e+00 : f32
    %136 = vector.broadcast %cst_48 : f32 to vector<1x32xf32>
    %137 = arith.divf %135, %136 : vector<1x32xf32>
    %138 = vector.broadcast %137 : vector<1x32xf32> to vector<2x32xf32>
    %139 = arith.subf %39, %138 : vector<2x32xf32>
    %140 = arith.mulf %139, %139 : vector<2x32xf32>
    %cst_49 = arith.constant dense<0.000000e+00> : vector<2xf32>
    %141 = vector.multi_reduction <add>, %140, %cst_49 [1] : vector<2x32xf32> to vector<2xf32>
    %142 = vector.shape_cast %141 : vector<2xf32> to vector<2x1xf32>
    %143 = math.sqrt %142 : vector<2x1xf32>
    %cst_50 = arith.constant 9.99999997E-7 : f32
    %144 = vector.broadcast %cst_50 : f32 to vector<2x1xf32>
    %145 = arith.addf %143, %144 : vector<2x1xf32>
    %146 = vector.broadcast %145 : vector<2x1xf32> to vector<2x32xf32>
    %147 = arith.divf %139, %146 : vector<2x32xf32>
    %148 = tpu.concatenate %119, %133, %147 in 1 : vector<2x32xf32>, vector<2x32xf32>, vector<2x32xf32> -> vector<2x96xf32>
    %cst_51 = arith.constant dense<0.000000e+00> : vector<96x96xf32>
    %149 = tpu.matmul %148, %148, %cst_51 {dimension_numbers = #tpu.dot_dimension_numbers<[0], [0], [1], [1], [0, 1, 1, 1], [], []>} : vector<2x96xf32>, vector<2x96xf32>, vector<96x96xf32> -> vector<96x96xf32>
    %150 = arith.mulf %149, %149 : vector<96x96xf32>
    %151 = vector.extract_strided_slice %150 {offsets = [32, 0], sizes = [32, 32], strides = [1, 1]} : vector<96x96xf32> to vector<32x32xf32>
    %152 = vector.shape_cast %151 : vector<32x32xf32> to vector<1x32x32xf32>
    %cst_52 = arith.constant dense<0.000000e+00> : vector<1xf32>
    %153 = vector.multi_reduction <add>, %152, %cst_52 [1, 2] : vector<1x32x32xf32> to vector<1xf32>
    %154 = vector.shape_cast %153 : vector<1xf32> to vector<1x1x1xf32>
    %155 = vector.extract %154[0, 0, 0] : f32 from vector<1x1x1xf32>
    %cst_53 = arith.constant 1.024000e+03 : f32
    %156 = arith.divf %155, %cst_53 : f32
    %157 = vector.extract_strided_slice %150 {offsets = [64, 0], sizes = [32, 32], strides = [1, 1]} : vector<96x96xf32> to vector<32x32xf32>
    %158 = vector.shape_cast %157 : vector<32x32xf32> to vector<1x32x32xf32>
    %cst_54 = arith.constant dense<0.000000e+00> : vector<1xf32>
    %159 = vector.multi_reduction <add>, %158, %cst_54 [1, 2] : vector<1x32x32xf32> to vector<1xf32>
    %160 = vector.shape_cast %159 : vector<1xf32> to vector<1x1x1xf32>
    %161 = vector.extract %160[0, 0, 0] : f32 from vector<1x1x1xf32>
    %cst_55 = arith.constant 1.024000e+03 : f32
    %162 = arith.divf %161, %cst_55 : f32
    %163 = arith.addf %156, %162 : f32
    %164 = vector.extract_strided_slice %150 {offsets = [64, 32], sizes = [32, 32], strides = [1, 1]} : vector<96x96xf32> to vector<32x32xf32>
    %165 = vector.shape_cast %164 : vector<32x32xf32> to vector<1x32x32xf32>
    %cst_56 = arith.constant dense<0.000000e+00> : vector<1xf32>
    %166 = vector.multi_reduction <add>, %165, %cst_56 [1, 2] : vector<1x32x32xf32> to vector<1xf32>
    %167 = vector.shape_cast %166 : vector<1xf32> to vector<1x1x1xf32>
    %168 = vector.extract %167[0, 0, 0] : f32 from vector<1x1x1xf32>
    %cst_57 = arith.constant 1.024000e+03 : f32
    %169 = arith.divf %168, %cst_57 : f32
    %170 = arith.addf %163, %169 : f32
    %cst_58 = arith.constant 3.000000e+00 : f32
    %171 = arith.divf %170, %cst_58 : f32
    %c0_59 = arith.constant 0 : index
    %172 = memref.load %arg6[%c0_59] : memref<2xf32, #tpu.memory_space<smem>>
    memref.store %171, %arg6[%c0_59] : memref<2xf32, #tpu.memory_space<smem>>
    %173 = tpu.concatenate %36, %38 in 0 : vector<2x32xf32>, vector<2x32xf32> -> vector<4x32xf32>
    %cst_60 = arith.constant dense<0.000000e+00> : vector<4x4xf32>
    %174 = tpu.matmul %173, %173, %cst_60 {dimension_numbers = #tpu.dot_dimension_numbers<[1], [1], [0], [0], [0, 0, 1, 0], [], []>} : vector<4x32xf32>, vector<4x32xf32>, vector<4x4xf32> -> vector<4x4xf32>
    %175 = tpu.iota {dimensions = array<i32: 0>} : vector<4x4xi32>
    %176 = tpu.iota {dimensions = array<i32: 1>} : vector<4x4xi32>
    %177 = arith.cmpi eq, %175, %176 : vector<4x4xi32>
    %cst_61 = arith.constant 0.000000e+00 : f32
    %178 = vector.broadcast %cst_61 : f32 to vector<4x4xf32>
    %179 = arith.select %177, %174, %178 : vector<4x4xi1>, vector<4x4xf32>
    %cst_62 = arith.constant dense<0.000000e+00> : vector<4xf32>
    %180 = vector.multi_reduction <add>, %179, %cst_62 [1] : vector<4x4xf32> to vector<4xf32>
    %181 = vector.shape_cast %180 : vector<4xf32> to vector<4x1xf32>
    %cst_63 = arith.constant dense<0.000000e+00> : vector<4xf32>
    %182 = vector.multi_reduction <add>, %179, %cst_63 [0] : vector<4x4xf32> to vector<4xf32>
    %183 = vector.shape_cast %182 : vector<4xf32> to vector<1x4xf32>
    %184 = vector.broadcast %181 : vector<4x1xf32> to vector<4x4xf32>
    %185 = vector.broadcast %183 : vector<1x4xf32> to vector<4x4xf32>
    %186 = arith.addf %184, %185 : vector<4x4xf32>
    %cst_64 = arith.constant 2.000000e+00 : f32
    %187 = vector.broadcast %cst_64 : f32 to vector<4x4xf32>
    %188 = arith.mulf %187, %174 : vector<4x4xf32>
    %189 = arith.subf %186, %188 : vector<4x4xf32>
    %cst_65 = arith.constant 0.000000e+00 : f32
    %190 = vector.broadcast %cst_65 : f32 to vector<4x4xf32>
    %191 = arith.maximumf %189, %190 : vector<4x4xf32>
    %192 = vector.shape_cast %191 : vector<4x4xf32> to vector<1x4x4xf32>
    %cst_66 = arith.constant dense<0.000000e+00> : vector<1xf32>
    %193 = vector.multi_reduction <add>, %192, %cst_66 [1, 2] : vector<1x4x4xf32> to vector<1xf32>
    %194 = vector.shape_cast %193 : vector<1xf32> to vector<1x1x1xf32>
    %195 = vector.extract %194[0, 0, 0] : f32 from vector<1x1x1xf32>
    %cst_67 = arith.constant 1.200000e+01 : f32
    %196 = arith.divf %195, %cst_67 : f32
    %cst_68 = arith.constant 4.000000e+00 : f32
    %197 = arith.divf %196, %cst_68 : f32
    %cst_69 = arith.constant 0.000000e+00 : f32
    %198 = vector.broadcast %cst_69 : f32 to vector<4x4xf32>
    %cst_70 = arith.constant 0.000000e+00 : f32
    %199 = vector.broadcast %cst_70 : f32 to vector<4x4xf32>
    %200 = arith.subf %199, %191 : vector<4x4xf32>
    %cst_71 = arith.constant 1.000000e+00 : f32
    %201 = arith.mulf %197, %cst_71 : f32
    %202 = vector.broadcast %201 : f32 to vector<4x4xf32>
    %203 = arith.divf %200, %202 : vector<4x4xf32>
    %204 = math.exp %203 : vector<4x4xf32>
    %205 = arith.addf %198, %204 : vector<4x4xf32>
    %cst_72 = arith.constant 0.000000e+00 : f32
    %206 = vector.broadcast %cst_72 : f32 to vector<4x4xf32>
    %207 = arith.subf %206, %191 : vector<4x4xf32>
    %cst_73 = arith.constant 2.000000e+00 : f32
    %208 = arith.mulf %197, %cst_73 : f32
    %209 = vector.broadcast %208 : f32 to vector<4x4xf32>
    %210 = arith.divf %207, %209 : vector<4x4xf32>
    %211 = math.exp %210 : vector<4x4xf32>
    %212 = arith.addf %205, %211 : vector<4x4xf32>
    %cst_74 = arith.constant 0.000000e+00 : f32
    %213 = vector.broadcast %cst_74 : f32 to vector<4x4xf32>
    %214 = arith.subf %213, %191 : vector<4x4xf32>
    %cst_75 = arith.constant 4.000000e+00 : f32
    %215 = arith.mulf %197, %cst_75 : f32
    %216 = vector.broadcast %215 : f32 to vector<4x4xf32>
    %217 = arith.divf %214, %216 : vector<4x4xf32>
    %218 = math.exp %217 : vector<4x4xf32>
    %219 = arith.addf %212, %218 : vector<4x4xf32>
    %cst_76 = arith.constant 0.000000e+00 : f32
    %220 = vector.broadcast %cst_76 : f32 to vector<4x4xf32>
    %221 = arith.subf %220, %191 : vector<4x4xf32>
    %cst_77 = arith.constant 8.000000e+00 : f32
    %222 = arith.mulf %197, %cst_77 : f32
    %223 = vector.broadcast %222 : f32 to vector<4x4xf32>
    %224 = arith.divf %221, %223 : vector<4x4xf32>
    %225 = math.exp %224 : vector<4x4xf32>
    %226 = arith.addf %219, %225 : vector<4x4xf32>
    %cst_78 = arith.constant 0.000000e+00 : f32
    %227 = vector.broadcast %cst_78 : f32 to vector<4x4xf32>
    %228 = arith.subf %227, %191 : vector<4x4xf32>
    %cst_79 = arith.constant 1.600000e+01 : f32
    %229 = arith.mulf %197, %cst_79 : f32
    %230 = vector.broadcast %229 : f32 to vector<4x4xf32>
    %231 = arith.divf %228, %230 : vector<4x4xf32>
    %232 = math.exp %231 : vector<4x4xf32>
    %233 = arith.addf %226, %232 : vector<4x4xf32>
    %234 = vector.extract_strided_slice %233 {offsets = [0, 0], sizes = [2, 2], strides = [1, 1]} : vector<4x4xf32> to vector<2x2xf32>
    %235 = vector.shape_cast %234 : vector<2x2xf32> to vector<1x2x2xf32>
    %cst_80 = arith.constant dense<0.000000e+00> : vector<1xf32>
    %236 = vector.multi_reduction <add>, %235, %cst_80 [1, 2] : vector<1x2x2xf32> to vector<1xf32>
    %237 = vector.shape_cast %236 : vector<1xf32> to vector<1x1x1xf32>
    %238 = vector.extract %237[0, 0, 0] : f32 from vector<1x1x1xf32>
    %239 = vector.extract_strided_slice %233 {offsets = [2, 2], sizes = [2, 2], strides = [1, 1]} : vector<4x4xf32> to vector<2x2xf32>
    %240 = vector.shape_cast %239 : vector<2x2xf32> to vector<1x2x2xf32>
    %cst_81 = arith.constant dense<0.000000e+00> : vector<1xf32>
    %241 = vector.multi_reduction <add>, %240, %cst_81 [1, 2] : vector<1x2x2xf32> to vector<1xf32>
    %242 = vector.shape_cast %241 : vector<1xf32> to vector<1x1x1xf32>
    %243 = vector.extract %242[0, 0, 0] : f32 from vector<1x1x1xf32>
    %244 = arith.addf %238, %243 : f32
    %245 = vector.extract_strided_slice %233 {offsets = [0, 2], sizes = [2, 2], strides = [1, 1]} : vector<4x4xf32> to vector<2x2xf32>
    %246 = vector.shape_cast %245 : vector<2x2xf32> to vector<1x2x2xf32>
    %cst_82 = arith.constant dense<0.000000e+00> : vector<1xf32>
    %247 = vector.multi_reduction <add>, %246, %cst_82 [1, 2] : vector<1x2x2xf32> to vector<1xf32>
    %248 = vector.shape_cast %247 : vector<1xf32> to vector<1x1x1xf32>
    %249 = vector.extract %248[0, 0, 0] : f32 from vector<1x1x1xf32>
    %250 = arith.subf %244, %249 : f32
    %251 = vector.extract_strided_slice %233 {offsets = [2, 0], sizes = [2, 2], strides = [1, 1]} : vector<4x4xf32> to vector<2x2xf32>
    %252 = vector.shape_cast %251 : vector<2x2xf32> to vector<1x2x2xf32>
    %cst_83 = arith.constant dense<0.000000e+00> : vector<1xf32>
    %253 = vector.multi_reduction <add>, %252, %cst_83 [1, 2] : vector<1x2x2xf32> to vector<1xf32>
    %254 = vector.shape_cast %253 : vector<1xf32> to vector<1x1x1xf32>
    %255 = vector.extract %254[0, 0, 0] : f32 from vector<1x1x1xf32>
    %256 = arith.subf %250, %255 : f32
    %cst_84 = arith.constant 4.000000e+00 : f32
    %257 = arith.divf %256, %cst_84 : f32
    %c1_85 = arith.constant 1 : index
    %258 = memref.load %arg6[%c1_85] : memref<2xf32, #tpu.memory_space<smem>>
    memref.store %257, %arg6[%c1_85] : memref<2xf32, #tpu.memory_space<smem>>
    return
  }
}

</mosaic_0001>

<llo_original>
// kernel: pallas_text_concat_vision.1
$region0: #{pallas_text_concat_vision.1}
  #allocation0 [shape = 'u32[]', space=smem, size = 0x4, offset = 0x4, fixed_abs, tag = 'smem constant byte address 0x4 - core index']
  #allocation1 [shape = 'u32[144,128]{1,0:T(1,128)}', space=vmem, size = 0x12000, scoped, tag = 'internal scratch']
  %s0 = inlined_call_operand.vmem [shape: f32[2,768], index: 0, kind: input, shape index: {}]
  %s1 = inlined_call_operand.vmem [shape: f32[2,1000], index: 1, kind: input, shape index: {}]
  %s2 = inlined_call_operand.vmem [shape: bf16[1768,32], index: 2, kind: input, shape index: {}]
  %s3 = inlined_call_operand.vmem [shape: bf16[288,64], index: 3, kind: input, shape index: {}]
  %s4 = inlined_call_operand.vmem [shape: f32[10,64], index: 4, kind: input, shape index: {}]
  %s5 = inlined_call_operand.hbm [shape: f32[2,2], index: 5, kind: output, shape index: {0}]
  %s6 = inlined_call_operand.vmem [shape: f32[2], index: 6, kind: output, shape index: {1}]
  %7 = xla_tuple %s5, %s6
  %s8 = sld [smem:[#allocation0]]
  $region38: #{pallas_text_concat_vision.1} parent=0
    _
  %s10 = ssub.s32 1, %s8
  %s11 = scalar_select 0, %s10, %s8
  $region1: #{pallas_text_concat_vision.1} parent=0
    #allocation2 [shape = 'u8[1024]{0}', space=vmem, size = 0x400, scoped, tag = 'output window, operand 0, single buffered']
    #allocation3 [shape = 's32[1]{0}', space=sflag, size = 0x4, scoped, tag = 'scoped memory for pallas_text_concat_vision.1']
    #allocation4 [shape = 's32[1]{0}', space=sflag, size = 0x4, scoped, tag = 'scoped memory for pallas_text_concat_vision.1']
    #allocation5 [shape = 'u8[512]{0}', space=smem, size = 0x200, scoped, tag = 'output window, operand 1, single buffered']
    %12 = vsyncpa [#allocation3], 0
    %13 = vsyncpa [#allocation4], 0
    // Predicated region
    $region2: #{pallas_text_concat_vision.1} parent=1 // pred_check
      _
    $region3: #{pallas_text_concat_vision.1} parent=1 // pred_check_branch
      %15 = sbr.rel (0) target = $region5
    $region4: #{pallas_text_concat_vision.1} parent=1 // pred_region
      _
    $region5: #{pallas_text_concat_vision.1} parent=1 // pred_fallthru
      _
    // Predicated region
    $region6: #{pallas_text_concat_vision.1} parent=1 // pred_check
      _
    $region7: #{pallas_text_concat_vision.1} parent=1 // pred_check_branch
      %17 = sbr.rel (0) target = $region9
    $region8: #{pallas_text_concat_vision.1} parent=1 // pred_region
      _
    $region9: #{pallas_text_concat_vision.1} parent=1 // pred_fallthru
      _
    // Predicated region
    $region10: #{pallas_text_concat_vision.1} parent=1 // pred_check
      _
    $region11: #{pallas_text_concat_vision.1} parent=1 // pred_check_branch
      %19 = sbr.rel (0) target = $region13
    $region12: #{pallas_text_concat_vision.1} parent=1 // pred_region
      _
    $region13: #{pallas_text_concat_vision.1} parent=1 // pred_fallthru
      _
    // Predicated region
    $region14: #{pallas_text_concat_vision.1} parent=1 // pred_check
      _
    $region15: #{pallas_text_concat_vision.1} parent=1 // pred_check_branch
      %21 = sbr.rel (0) target = $region17
    $region16: #{pallas_text_concat_vision.1} parent=1 // pred_region
      _
    $region17: #{pallas_text_concat_vision.1} parent=1 // pred_fallthru
      _
    // Predicated region
    $region18: #{pallas_text_concat_vision.1} parent=1 // pred_check
      _
    $region19: #{pallas_text_concat_vision.1} parent=1 // pred_check_branch
      %23 = sbr.rel (0) target = $region21
    $region20: #{pallas_text_concat_vision.1} parent=1 // pred_region
      _
    $region21: #{pallas_text_concat_vision.1} parent=1 // pred_fallthru
      _
    %v25 = vld [vmem:[%s4] sm:$0x1]
    %v26 = vld [vmem:[%s4 + $0x1] sm:$0x1]
    %v27 = vld [vmem:[%s4 + $0x2] sm:$0x1]
    %v28 = vld [vmem:[%s4 + $0x3] sm:$0x1]
    %v29 = vld [vmem:[%s4 + $0x4] sm:$0x1]
    %v30 = vld [vmem:[%s4 + $0x5] sm:$0x1]
    %v31 = vld [vmem:[%s4 + $0x6] sm:$0x1]
    %v32 = vld [vmem:[%s4 + $0x7] sm:$0x1]
    %v33 = vld [vmem:[%s4 + $0x8] sm:$0x1]
    %v34 = vld [vmem:[%s4 + $0x9] sm:$0x1]
    %v35 = vld [vmem:[%s0] sm:$0xff]
    %v36 = vld [vmem:[%s0 + $0x8] sm:$0xf]
    %v39 = vcombine.high %v35, %v35
    %v41 = vunpack.c.l.s4 1983009808
    %v42 = vunpack.c.0.s8 %v41
    %v43 = vlaneseq
    %v44 = vshrl.u32 %v43, 7
    %v45 = vsub.s32 %v42, %v44
    %v46 = vrot.slane %v35, %v45
    %v48 = vunpack.c.l.s4 1983009808
    %v49 = vunpack.c.0.s8 %v48
    %v50 = vlaneseq
    %v51 = vshrl.u32 %v50, 7
    %v52 = vsub.s32 %v49, %v51
    %v53 = vrot.slane %v39, %v52
    %v54 = vcombine.high %v46, %v46
    %v55 = vcombine.high %v53, %v53
    %v57 = vunpack.c.l.s4 1983009808
    %v58 = vunpack.c.0.s8 %v57
    %v59 = vlaneseq
    %v60 = vshrl.u32 %v59, 7
    %v61 = vsub.s32 %v58, %v60
    %v62 = vrot.slane %v36, %v61
    %v63 = vcombine.high %v62, %v62
    %v70 = vpack.c.bf16 %v46, %v46
    %v71 = vpack.c.bf16 %v54, %v54
    %v72 = vpack.c.bf16 %v53, %v53
    %v73 = vpack.c.bf16 %v55, %v55
    %v74 = vpack.c.bf16 %v62, %v62
    %v75 = vpack.c.bf16 %v63, %v63
    %v76 = vld [vmem:[%s2] sm:$0xf]
    %v77 = vld [vmem:[%s2 + $0x4] sm:$0xf]
    %v78 = vld [vmem:[%s2 + $0x8] sm:$0xf]
    %v79 = vld [vmem:[%s2 + $0xc] sm:$0xf]
    %v80 = vld [vmem:[%s2 + $0x10] sm:$0xf]
    %v81 = vld [vmem:[%s2 + $0x14] sm:$0xf]
    %v82 = vld [vmem:[%s2 + $0x18] sm:$0xf]
    %v83 = vld [vmem:[%s2 + $0x1c] sm:$0xf]
    %v84 = vld [vmem:[%s2 + $0x20] sm:$0xf]
    %v85 = vld [vmem:[%s2 + $0x24] sm:$0xf]
    %v86 = vld [vmem:[%s2 + $0x28] sm:$0xf]
    %v87 = vld [vmem:[%s2 + $0x2c] sm:$0xf]
    %v88 = vld [vmem:[%s2 + $0x30] sm:$0xf]
    %v89 = vld [vmem:[%s2 + $0x34] sm:$0xf]
    %v90 = vld [vmem:[%s2 + $0x38] sm:$0xf]
    %v91 = vld [vmem:[%s2 + $0x3c] sm:$0xf]
    %v92 = vld [vmem:[%s2 + $0x40] sm:$0xf]
    %v93 = vld [vmem:[%s2 + $0x44] sm:$0xf]
    %v94 = vld [vmem:[%s2 + $0x48] sm:$0xf]
    %v95 = vld [vmem:[%s2 + $0x4c] sm:$0xf]
    %v96 = vld [vmem:[%s2 + $0x50] sm:$0xf]
    %v97 = vld [vmem:[%s2 + $0x54] sm:$0xf]
    %v98 = vld [vmem:[%s2 + $0x58] sm:$0xf]
    %v99 = vld [vmem:[%s2 + $0x5c] sm:$0xf]
    %v100 = vld [vmem:[%s2 + $0x60] sm:$0xf]
    %v101 = vld [vmem:[%s2 + $0x64] sm:$0xf]
    %v102 = vld [vmem:[%s2 + $0x68] sm:$0xf]
    %v103 = vld [vmem:[%s2 + $0x6c] sm:$0xf]
    %v104 = vld [vmem:[%s2 + $0x70] sm:$0xf]
    %v105 = vld [vmem:[%s2 + $0x74] sm:$0xf]
    %v106 = vld [vmem:[%s2 + $0x78] sm:$0xf]
    %v107 = vld [vmem:[%s2 + $0x7c] sm:$0xf]
    %v108 = vld [vmem:[%s2 + $0x80] sm:$0xf]
    %v109 = vld [vmem:[%s2 + $0x84] sm:$0xf]
    %v110 = vld [vmem:[%s2 + $0x88] sm:$0xf]
    %v111 = vld [vmem:[%s2 + $0x8c] sm:$0xf]
    %v112 = vld [vmem:[%s2 + $0x90] sm:$0xf]
    %v113 = vld [vmem:[%s2 + $0x94] sm:$0xf]
    %v114 = vld [vmem:[%s2 + $0x98] sm:$0xf]
    %v115 = vld [vmem:[%s2 + $0x9c] sm:$0xf]
    %v116 = vld [vmem:[%s2 + $0xa0] sm:$0xf]
    %v117 = vld [vmem:[%s2 + $0xa4] sm:$0xf]
    %v118 = vld [vmem:[%s2 + $0xa8] sm:$0xf]
    %v119 = vld [vmem:[%s2 + $0xac] sm:$0xf]
    %v120 = vld [vmem:[%s2 + $0xb0] sm:$0xf]
    %v121 = vld [vmem:[%s2 + $0xb4] sm:$0xf]
    %v122 = vld [vmem:[%s2 + $0xb8] sm:$0xf]
    %v123 = vld [vmem:[%s2 + $0xbc] sm:$0xf]
    %v124 = vld [vmem:[%s2 + $0xc0] sm:$0xf]
    %v125 = vld [vmem:[%s2 + $0xc4] sm:$0xf]
    %v126 = vld [vmem:[%s2 + $0xc8] sm:$0xf]
    %v127 = vld [vmem:[%s2 + $0xcc] sm:$0xf]
    %v128 = vld [vmem:[%s2 + $0xd0] sm:$0xf]
    %v129 = vld [vmem:[%s2 + $0xd4] sm:$0xf]
    %v130 = vld [vmem:[%s2 + $0xd8] sm:$0xf]
    %v131 = vld [vmem:[%s2 + $0xdc] sm:$0xf]
    %v132 = vld [vmem:[%s2 + $0xe0] sm:$0xf]
    %v133 = vld [vmem:[%s2 + $0xe4] sm:$0xf]
    %v134 = vld [vmem:[%s2 + $0xe8] sm:$0xf]
    %v135 = vld [vmem:[%s2 + $0xec] sm:$0xf]
    %v136 = vld [vmem:[%s2 + $0xf0] sm:$0xf]
    %v137 = vld [vmem:[%s2 + $0xf4] sm:$0xf]
    %v138 = vld [vmem:[%s2 + $0xf8] sm:$0xf]
    %v139 = vld [vmem:[%s2 + $0xfc] sm:$0xf]
    %v140 = vld [vmem:[%s2 + $0x100] sm:$0xf]
    %v141 = vld [vmem:[%s2 + $0x104] sm:$0xf]
    %v142 = vld [vmem:[%s2 + $0x108] sm:$0xf]
    %v143 = vld [vmem:[%s2 + $0x10c] sm:$0xf]
    %v144 = vld [vmem:[%s2 + $0x110] sm:$0xf]
    %v145 = vld [vmem:[%s2 + $0x114] sm:$0xf]
    %v146 = vld [vmem:[%s2 + $0x118] sm:$0xf]
    %v147 = vld [vmem:[%s2 + $0x11c] sm:$0xf]
    %v148 = vld [vmem:[%s2 + $0x120] sm:$0xf]
    %v149 = vld [vmem:[%s2 + $0x124] sm:$0xf]
    %v150 = vld [vmem:[%s2 + $0x128] sm:$0xf]
    %v151 = vld [vmem:[%s2 + $0x12c] sm:$0xf]
    %v152 = vld [vmem:[%s2 + $0x130] sm:$0xf]
    %v153 = vld [vmem:[%s2 + $0x134] sm:$0xf]
    %v154 = vld [vmem:[%s2 + $0x138] sm:$0xf]
    %v155 = vld [vmem:[%s2 + $0x13c] sm:$0xf]
    %v156 = vld [vmem:[%s2 + $0x140] sm:$0xf]
    %v157 = vld [vmem:[%s2 + $0x144] sm:$0xf]
    %v158 = vld [vmem:[%s2 + $0x148] sm:$0xf]
    %v159 = vld [vmem:[%s2 + $0x14c] sm:$0xf]
    %v160 = vld [vmem:[%s2 + $0x150] sm:$0xf]
    %v161 = vld [vmem:[%s2 + $0x154] sm:$0xf]
    %v162 = vld [vmem:[%s2 + $0x158] sm:$0xf]
    %v163 = vld [vmem:[%s2 + $0x15c] sm:$0xf]
    %v164 = vld [vmem:[%s2 + $0x160] sm:$0xf]
    %v165 = vld [vmem:[%s2 + $0x164] sm:$0xf]
    %v166 = vld [vmem:[%s2 + $0x168] sm:$0xf]
    %v167 = vld [vmem:[%s2 + $0x16c] sm:$0xf]
    %v168 = vld [vmem:[%s2 + $0x170] sm:$0xf]
    %v169 = vld [vmem:[%s2 + $0x174] sm:$0xf]
    %v170 = vld [vmem:[%s2 + $0x178] sm:$0xf]
    %v171 = vld [vmem:[%s2 + $0x17c] sm:$0xf]
    %v172 = vlaneseq
    %v173 = vshrl.u32 %v172, 7
    %v174 = vsub.s32 0, %v173
    %v175 = vrot.slane %v25, %v174
    %v272 = vunpack.c.l.b16 %v76
    %v273 = vunpack.c.l.b16 %v77
    %v274 = vunpack.c.l.b16 %v78
    %v275 = vunpack.c.l.b16 %v79
    %v276 = vunpack.c.l.b16 %v80
    %v277 = vunpack.c.l.b16 %v81
    %v278 = vunpack.c.l.b16 %v82
    %v279 = vunpack.c.l.b16 %v83
    %v280 = vunpack.c.l.b16 %v84
    %v281 = vunpack.c.l.b16 %v85
    %v282 = vunpack.c.l.b16 %v86
    %v283 = vunpack.c.l.b16 %v87
    %v284 = vunpack.c.l.b16 %v88
    %v285 = vunpack.c.l.b16 %v89
    %v286 = vunpack.c.l.b16 %v90
    %v287 = vunpack.c.l.b16 %v91
    %v288 = vunpack.c.l.b16 %v92
    %v289 = vunpack.c.l.b16 %v93
    %v290 = vunpack.c.l.b16 %v94
    %v291 = vunpack.c.l.b16 %v95
    %v292 = vunpack.c.l.b16 %v96
    %v293 = vunpack.c.l.b16 %v97
    %v294 = vunpack.c.l.b16 %v98
    %v295 = vunpack.c.l.b16 %v99
    %v296 = vunpack.c.l.b16 %v100
    %v297 = vunpack.c.l.b16 %v101
    %v298 = vunpack.c.l.b16 %v102
    %v299 = vunpack.c.l.b16 %v103
    %v300 = vunpack.c.l.b16 %v104
    %v301 = vunpack.c.l.b16 %v105
    %v302 = vunpack.c.l.b16 %v106
    %v303 = vunpack.c.l.b16 %v107
    %v304 = vunpack.c.l.b16 %v108
    %v305 = vunpack.c.l.b16 %v109
    %v306 = vunpack.c.l.b16 %v110
    %v307 = vunpack.c.l.b16 %v111
    %v308 = vunpack.c.l.b16 %v112
    %v309 = vunpack.c.l.b16 %v113
    %v310 = vunpack.c.l.b16 %v114
    %v311 = vunpack.c.l.b16 %v115
    %v312 = vunpack.c.l.b16 %v116
    %v313 = vunpack.c.l.b16 %v117
    %v314 = vunpack.c.l.b16 %v118
    %v315 = vunpack.c.l.b16 %v119
    %v316 = vunpack.c.l.b16 %v120
    %v317 = vunpack.c.l.b16 %v121
    %v318 = vunpack.c.l.b16 %v122
    %v319 = vunpack.c.l.b16 %v123
    %v320 = vunpack.c.l.b16 %v124
    %v321 = vunpack.c.l.b16 %v125
    %v322 = vunpack.c.l.b16 %v126
    %v323 = vunpack.c.l.b16 %v127
    %v324 = vunpack.c.l.b16 %v128
    %v325 = vunpack.c.l.b16 %v129
    %v326 = vunpack.c.l.b16 %v130
    %v327 = vunpack.c.l.b16 %v131
    %v328 = vunpack.c.l.b16 %v132
    %v329 = vunpack.c.l.b16 %v133
    %v330 = vunpack.c.l.b16 %v134
    %v331 = vunpack.c.l.b16 %v135
    %v332 = vunpack.c.l.b16 %v136
    %v333 = vunpack.c.l.b16 %v137
    %v334 = vunpack.c.l.b16 %v138
    %v335 = vunpack.c.l.b16 %v139
    %v336 = vunpack.c.l.b16 %v140
    %v337 = vunpack.c.l.b16 %v141
    %v338 = vunpack.c.l.b16 %v142
    %v339 = vunpack.c.l.b16 %v143
    %v340 = vunpack.c.l.b16 %v144
    %v341 = vunpack.c.l.b16 %v145
    %v342 = vunpack.c.l.b16 %v146
    %v343 = vunpack.c.l.b16 %v147
    %v344 = vunpack.c.l.b16 %v148
    %v345 = vunpack.c.l.b16 %v149
    %v346 = vunpack.c.l.b16 %v150
    %v347 = vunpack.c.l.b16 %v151
    %v348 = vunpack.c.l.b16 %v152
    %v349 = vunpack.c.l.b16 %v153
    %v350 = vunpack.c.l.b16 %v154
    %v351 = vunpack.c.l.b16 %v155
    %v352 = vunpack.c.l.b16 %v156
    %v353 = vunpack.c.l.b16 %v157
    %v354 = vunpack.c.l.b16 %v158
    %v355 = vunpack.c.l.b16 %v159
    %v356 = vunpack.c.l.b16 %v160
    %v357 = vunpack.c.l.b16 %v161
    %v358 = vunpack.c.l.b16 %v162
    %v359 = vunpack.c.l.b16 %v163
    %v360 = vunpack.c.l.b16 %v164
    %v361 = vunpack.c.l.b16 %v165
    %v362 = vunpack.c.l.b16 %v166
    %v363 = vunpack.c.l.b16 %v167
    %v364 = vunpack.c.l.b16 %v168
    %v365 = vunpack.c.l.b16 %v169
    %v366 = vunpack.c.l.b16 %v170
    %v367 = vunpack.c.l.b16 %v171
    %v368 = vpack.c.b16 %v273, %v272
    %v369 = vpack.c.b16 %v275, %v274
    %v370 = vpack.c.b16 %v277, %v276
    %v371 = vpack.c.b16 %v279, %v278
    %v372 = vpack.c.b16 %v281, %v280
    %v373 = vpack.c.b16 %v283, %v282
    %v374 = vpack.c.b16 %v285, %v284
    %v375 = vpack.c.b16 %v287, %v286
    %v376 = vpack.c.b16 %v289, %v288
    %v377 = vpack.c.b16 %v291, %v290
    %v378 = vpack.c.b16 %v293, %v292
    %v379 = vpack.c.b16 %v295, %v294
    %v380 = vpack.c.b16 %v297, %v296
    %v381 = vpack.c.b16 %v299, %v298
    %v382 = vpack.c.b16 %v301, %v300
    %v383 = vpack.c.b16 %v303, %v302
    %v384 = vpack.c.b16 %v305, %v304
    %v385 = vpack.c.b16 %v307, %v306
    %v386 = vpack.c.b16 %v309, %v308
    %v387 = vpack.c.b16 %v311, %v310
    %v388 = vpack.c.b16 %v313, %v312
    %v389 = vpack.c.b16 %v315, %v314
    %v390 = vpack.c.b16 %v317, %v316
    %v391 = vpack.c.b16 %v319, %v318
    %v392 = vpack.c.b16 %v321, %v320
    %v393 = vpack.c.b16 %v323, %v322
    %v394 = vpack.c.b16 %v325, %v324
    %v395 = vpack.c.b16 %v327, %v326
    %v396 = vpack.c.b16 %v329, %v328
    %v397 = vpack.c.b16 %v331, %v330
    %v398 = vpack.c.b16 %v333, %v332
    %v399 = vpack.c.b16 %v335, %v334
    %v400 = vpack.c.b16 %v337, %v336
    %v401 = vpack.c.b16 %v339, %v338
    %v402 = vpack.c.b16 %v341, %v340
    %v403 = vpack.c.b16 %v343, %v342
    %v404 = vpack.c.b16 %v345, %v344
    %v405 = vpack.c.b16 %v347, %v346
    %v406 = vpack.c.b16 %v349, %v348
    %v407 = vpack.c.b16 %v351, %v350
    %v408 = vpack.c.b16 %v353, %v352
    %v409 = vpack.c.b16 %v355, %v354
    %v410 = vpack.c.b16 %v357, %v356
    %v411 = vpack.c.b16 %v359, %v358
    %v412 = vpack.c.b16 %v361, %v360
    %v413 = vpack.c.b16 %v363, %v362
    %v414 = vpack.c.b16 %v365, %v364
    %v415 = vpack.c.b16 %v367, %v366
    %464 = vmatprep.subr.bf16.mxu0 0
    %465 = vmatpush1.bf16.msra.mxu0 %v375
    %466 = vmatprep.subr.bf16.mxu0 0
    %467 = vmatpush1.bf16.msra.mxu0 %v374
    %468 = vmatprep.subr.bf16.mxu0 0
    %469 = vmatpush1.bf16.msra.mxu0 %v373
    %470 = vmatprep.subr.bf16.mxu0 0
    %471 = vmatpush1.bf16.msra.mxu0 %v372
    %472 = vmatprep.subr.bf16.mxu0 0
    %473 = vmatpush1.bf16.msra.mxu0 %v371
    %474 = vmatprep.subr.bf16.mxu0 0
    %475 = vmatpush1.bf16.msra.mxu0 %v370
    %476 = vmatprep.subr.bf16.mxu0 0
    %477 = vmatpush1.bf16.msra.mxu0 %v369
    %478 = vmatprep.subr.bf16.mxu0 0
    %479 = vmatpush1.bf16.msra.mxu0 %v368
    %480 = vmatprep.subr.bf16.mxu0 0
    %481 = vmatpush2.bf16.msra.mxu0 %v383
    %482 = vmatprep.subr.bf16.mxu0 0
    %483 = vmatpush2.bf16.msra.mxu0 %v382
    %484 = vmatprep.subr.bf16.mxu0 0
    %485 = vmatpush2.bf16.msra.mxu0 %v381
    %486 = vmatprep.subr.bf16.mxu0 0
    %487 = vmatpush2.bf16.msra.mxu0 %v380
    %488 = vmatprep.subr.bf16.mxu0 0
    %489 = vmatpush2.bf16.msra.mxu0 %v379
    %490 = vmatprep.subr.bf16.mxu0 0
    %491 = vmatpush2.bf16.msra.mxu0 %v378
    %492 = vmatprep.subr.bf16.mxu0 0
    %493 = vmatpush2.bf16.msra.mxu0 %v377
    %494 = vmatprep.subr.bf16.mxu0 0
    %495 = vmatpush2.bf16.msra.mxu0 %v376
    %496 = vmatprep.mubr.bf16.mxu0 %v71
    %497 = vmatmul.mubr.bf16.gmra.mxu0 %v70
    %v498 = vpop.f32.mrf.mxu0
    %v499 = vadd.f32 %v175, %v498
    %v500 = vpop.f32.mrf.mxu0
    %v501 = vpop.f32.mrf.mxu0
    %v502 = vpop.f32.mrf.mxu0
    %503 = vdwg.mxu0
    %504 = vmatprep.subr.bf16.mxu0 0
    %505 = vmatpush1.bf16.msra.mxu0 %v391
    %506 = vmatprep.subr.bf16.mxu0 0
    %507 = vmatpush1.bf16.msra.mxu0 %v390
    %508 = vmatprep.subr.bf16.mxu0 0
    %509 = vmatpush1.bf16.msra.mxu0 %v389
    %510 = vmatprep.subr.bf16.mxu0 0
    %511 = vmatpush1.bf16.msra.mxu0 %v388
    %512 = vmatprep.subr.bf16.mxu0 0
    %513 = vmatpush1.bf16.msra.mxu0 %v387
    %514 = vmatprep.subr.bf16.mxu0 0
    %515 = vmatpush1.bf16.msra.mxu0 %v386
    %516 = vmatprep.subr.bf16.mxu0 0
    %517 = vmatpush1.bf16.msra.mxu0 %v385
    %518 = vmatprep.subr.bf16.mxu0 0
    %519 = vmatpush1.bf16.msra.mxu0 %v384
    %520 = vmatprep.subr.bf16.mxu0 0
    %521 = vmatpush2.bf16.msra.mxu0 %v399
    %522 = vmatprep.subr.bf16.mxu0 0
    %523 = vmatpush2.bf16.msra.mxu0 %v398
    %524 = vmatprep.subr.bf16.mxu0 0
    %525 = vmatpush2.bf16.msra.mxu0 %v397
    %526 = vmatprep.subr.bf16.mxu0 0
    %527 = vmatpush2.bf16.msra.mxu0 %v396
    %528 = vmatprep.subr.bf16.mxu0 0
    %529 = vmatpush2.bf16.msra.mxu0 %v395
    %530 = vmatprep.subr.bf16.mxu0 0
    %531 = vmatpush2.bf16.msra.mxu0 %v394
    %532 = vmatprep.subr.bf16.mxu0 0
    %533 = vmatpush2.bf16.msra.mxu0 %v393
    %534 = vmatprep.subr.bf16.mxu0 0
    %535 = vmatpush2.bf16.msra.mxu0 %v392
    %536 = vmatprep.mubr.bf16.mxu0 %v73
    %537 = vmatmul.mubr.bf16.gmra.mxu0 %v72
    %v538 = vpop.f32.mrf.mxu0
    %v539 = vadd.f32 %v499, %v538
    %v540 = vpop.f32.mrf.mxu0
    %v541 = vpop.f32.mrf.mxu0
    %v542 = vpop.f32.mrf.mxu0
    %543 = vdwg.mxu0
    %544 = vmatprep.subr.bf16.mxu0 0
    %545 = vmatpush1.bf16.msra.mxu0 %v407
    %546 = vmatprep.subr.bf16.mxu0 0
    %547 = vmatpush1.bf16.msra.mxu0 %v406
    %548 = vmatprep.subr.bf16.mxu0 0
    %549 = vmatpush1.bf16.msra.mxu0 %v405
    %550 = vmatprep.subr.bf16.mxu0 0
    %551 = vmatpush1.bf16.msra.mxu0 %v404
    %552 = vmatprep.subr.bf16.mxu0 0
    %553 = vmatpush1.bf16.msra.mxu0 %v403
    %554 = vmatprep.subr.bf16.mxu0 0
    %555 = vmatpush1.bf16.msra.mxu0 %v402
    %556 = vmatprep.subr.bf16.mxu0 0
    %557 = vmatpush1.bf16.msra.mxu0 %v401
    %558 = vmatprep.subr.bf16.mxu0 0
    %559 = vmatpush1.bf16.msra.mxu0 %v400
    %560 = vmatprep.subr.bf16.mxu0 0
    %561 = vmatpush2.bf16.msra.mxu0 %v415
    %562 = vmatprep.subr.bf16.mxu0 0
    %563 = vmatpush2.bf16.msra.mxu0 %v414
    %564 = vmatprep.subr.bf16.mxu0 0
    %565 = vmatpush2.bf16.msra.mxu0 %v413
    %566 = vmatprep.subr.bf16.mxu0 0
    %567 = vmatpush2.bf16.msra.mxu0 %v412
    %568 = vmatprep.subr.bf16.mxu0 0
    %569 = vmatpush2.bf16.msra.mxu0 %v411
    %570 = vmatprep.subr.bf16.mxu0 0
    %571 = vmatpush2.bf16.msra.mxu0 %v410
    %572 = vmatprep.subr.bf16.mxu0 0
    %573 = vmatpush2.bf16.msra.mxu0 %v409
    %574 = vmatprep.subr.bf16.mxu0 0
    %575 = vmatpush2.bf16.msra.mxu0 %v408
    %576 = vmatprep.mubr.bf16.mxu0 %v75
    %577 = vmatmul.mubr.bf16.gmra.mxu0 %v74
    %v578 = vpop.f32.mrf.mxu0
    %v579 = vadd.f32 %v539, %v578
    %v580 = vpop.f32.mrf.mxu0
    %v581 = vpop.f32.mrf.mxu0
    %v582 = vpop.f32.mrf.mxu0
    %583 = vdwg.mxu0
    %v584 = vmax.f32 %v579, 0.0
    %v585 = vld [vmem:[%s1] sm:$0xff]
    %v586 = vld [vmem:[%s1 + $0x8] sm:$0xff]
    %v589 = vcombine.high %v585, %v585
    %v591 = vunpack.c.l.s4 1983009808
    %v592 = vunpack.c.0.s8 %v591
    %v593 = vlaneseq
    %v594 = vshrl.u32 %v593, 7
    %v595 = vsub.s32 %v592, %v594
    %v596 = vrot.slane %v585, %v595
    %v598 = vunpack.c.l.s4 1983009808
    %v599 = vunpack.c.0.s8 %v598
    %v600 = vlaneseq
    %v601 = vshrl.u32 %v600, 7
    %v602 = vsub.s32 %v599, %v601
    %v603 = vrot.slane %v589, %v602
    %v604 = vcombine.high %v596, %v596
    %v605 = vcombine.high %v603, %v603
    %v606 = vcombine.high %v586, %v586
    %v608 = vunpack.c.l.s4 1983009808
    %v609 = vunpack.c.0.s8 %v608
    %v610 = vlaneseq
    %v611 = vshrl.u32 %v610, 7
    %v612 = vsub.s32 %v609, %v611
    %v613 = vrot.slane %v586, %v612
    %v615 = vunpack.c.l.s4 1983009808
    %v616 = vunpack.c.0.s8 %v615
    %v617 = vlaneseq
    %v618 = vshrl.u32 %v617, 7
    %v619 = vsub.s32 %v616, %v618
    %v620 = vrot.slane %v606, %v619
    %v621 = vcombine.high %v613, %v613
    %v622 = vcombine.high %v620, %v620
    %v631 = vpack.c.bf16 %v596, %v596
    %v632 = vpack.c.bf16 %v604, %v604
    %v633 = vpack.c.bf16 %v603, %v603
    %v634 = vpack.c.bf16 %v605, %v605
    %v635 = vpack.c.bf16 %v613, %v613
    %v636 = vpack.c.bf16 %v621, %v621
    %v637 = vpack.c.bf16 %v620, %v620
    %v638 = vpack.c.bf16 %v622, %v622
    %v639 = vld [vmem:[%s2 + $0x180] sm:$0xf]
    %v640 = vld [vmem:[%s2 + $0x184] sm:$0xf]
    %v641 = vld [vmem:[%s2 + $0x188] sm:$0xf]
    %v642 = vld [vmem:[%s2 + $0x18c] sm:$0xf]
    %v643 = vld [vmem:[%s2 + $0x190] sm:$0xf]
    %v644 = vld [vmem:[%s2 + $0x194] sm:$0xf]
    %v645 = vld [vmem:[%s2 + $0x198] sm:$0xf]
    %v646 = vld [vmem:[%s2 + $0x19c] sm:$0xf]
    %v647 = vld [vmem:[%s2 + $0x1a0] sm:$0xf]
    %v648 = vld [vmem:[%s2 + $0x1a4] sm:$0xf]
    %v649 = vld [vmem:[%s2 + $0x1a8] sm:$0xf]
    %v650 = vld [vmem:[%s2 + $0x1ac] sm:$0xf]
    %v651 = vld [vmem:[%s2 + $0x1b0] sm:$0xf]
    %v652 = vld [vmem:[%s2 + $0x1b4] sm:$0xf]
    %v653 = vld [vmem:[%s2 + $0x1b8] sm:$0xf]
    %v654 = vld [vmem:[%s2 + $0x1bc] sm:$0xf]
    %v655 = vld [vmem:[%s2 + $0x1c0] sm:$0xf]
    %v656 = vld [vmem:[%s2 + $0x1c4] sm:$0xf]
    %v657 = vld [vmem:[%s2 + $0x1c8] sm:$0xf]
    %v658 = vld [vmem:[%s2 + $0x1cc] sm:$0xf]
    %v659 = vld [vmem:[%s2 + $0x1d0] sm:$0xf]
    %v660 = vld [vmem:[%s2 + $0x1d4] sm:$0xf]
    %v661 = vld [vmem:[%s2 + $0x1d8] sm:$0xf]
    %v662 = vld [vmem:[%s2 + $0x1dc] sm:$0xf]
    %v663 = vld [vmem:[%s2 + $0x1e0] sm:$0xf]
    %v664 = vld [vmem:[%s2 + $0x1e4] sm:$0xf]
    %v665 = vld [vmem:[%s2 + $0x1e8] sm:$0xf]
    %v666 = vld [vmem:[%s2 + $0x1ec] sm:$0xf]
    %v667 = vld [vmem:[%s2 + $0x1f0] sm:$0xf]
    %v668 = vld [vmem:[%s2 + $0x1f4] sm:$0xf]
    %v669 = vld [vmem:[%s2 + $0x1f8] sm:$0xf]
    %v670 = vld [vmem:[%s2 + $0x1fc] sm:$0xf]
    %v671 = vld [vmem:[%s2 + $0x200] sm:$0xf]
    %v672 = vld [vmem:[%s2 + $0x204] sm:$0xf]
    %v673 = vld [vmem:[%s2 + $0x208] sm:$0xf]
    %v674 = vld [vmem:[%s2 + $0x20c] sm:$0xf]
    %v675 = vld [vmem:[%s2 + $0x210] sm:$0xf]
    %v676 = vld [vmem:[%s2 + $0x214] sm:$0xf]
    %v677 = vld [vmem:[%s2 + $0x218] sm:$0xf]
    %v678 = vld [vmem:[%s2 + $0x21c] sm:$0xf]
    %v679 = vld [vmem:[%s2 + $0x220] sm:$0xf]
    %v680 = vld [vmem:[%s2 + $0x224] sm:$0xf]
    %v681 = vld [vmem:[%s2 + $0x228] sm:$0xf]
    %v682 = vld [vmem:[%s2 + $0x22c] sm:$0xf]
    %v683 = vld [vmem:[%s2 + $0x230] sm:$0xf]
    %v684 = vld [vmem:[%s2 + $0x234] sm:$0xf]
    %v685 = vld [vmem:[%s2 + $0x238] sm:$0xf]
    %v686 = vld [vmem:[%s2 + $0x23c] sm:$0xf]
    %v687 = vld [vmem:[%s2 + $0x240] sm:$0xf]
    %v688 = vld [vmem:[%s2 + $0x244] sm:$0xf]
    %v689 = vld [vmem:[%s2 + $0x248] sm:$0xf]
    %v690 = vld [vmem:[%s2 + $0x24c] sm:$0xf]
    %v691 = vld [vmem:[%s2 + $0x250] sm:$0xf]
    %v692 = vld [vmem:[%s2 + $0x254] sm:$0xf]
    %v693 = vld [vmem:[%s2 + $0x258] sm:$0xf]
    %v694 = vld [vmem:[%s2 + $0x25c] sm:$0xf]
    %v695 = vld [vmem:[%s2 + $0x260] sm:$0xf]
    %v696 = vld [vmem:[%s2 + $0x264] sm:$0xf]
    %v697 = vld [vmem:[%s2 + $0x268] sm:$0xf]
    %v698 = vld [vmem:[%s2 + $0x26c] sm:$0xf]
    %v699 = vld [vmem:[%s2 + $0x270] sm:$0xf]
    %v700 = vld [vmem:[%s2 + $0x274] sm:$0xf]
    %v701 = vld [vmem:[%s2 + $0x278] sm:$0xf]
    %v702 = vld [vmem:[%s2 + $0x27c] sm:$0xf]
    %v703 = vld [vmem:[%s2 + $0x280] sm:$0xf]
    %v704 = vld [vmem:[%s2 + $0x284] sm:$0xf]
    %v705 = vld [vmem:[%s2 + $0x288] sm:$0xf]
    %v706 = vld [vmem:[%s2 + $0x28c] sm:$0xf]
    %v707 = vld [vmem:[%s2 + $0x290] sm:$0xf]
    %v708 = vld [vmem:[%s2 + $0x294] sm:$0xf]
    %v709 = vld [vmem:[%s2 + $0x298] sm:$0xf]
    %v710 = vld [vmem:[%s2 + $0x29c] sm:$0xf]
    %v711 = vld [vmem:[%s2 + $0x2a0] sm:$0xf]
    %v712 = vld [vmem:[%s2 + $0x2a4] sm:$0xf]
    %v713 = vld [vmem:[%s2 + $0x2a8] sm:$0xf]
    %v714 = vld [vmem:[%s2 + $0x2ac] sm:$0xf]
    %v715 = vld [vmem:[%s2 + $0x2b0] sm:$0xf]
    %v716 = vld [vmem:[%s2 + $0x2b4] sm:$0xf]
    %v717 = vld [vmem:[%s2 + $0x2b8] sm:$0xf]
    %v718 = vld [vmem:[%s2 + $0x2bc] sm:$0xf]
    %v719 = vld [vmem:[%s2 + $0x2c0] sm:$0xf]
    %v720 = vld [vmem:[%s2 + $0x2c4] sm:$0xf]
    %v721 = vld [vmem:[%s2 + $0x2c8] sm:$0xf]
    %v722 = vld [vmem:[%s2 + $0x2cc] sm:$0xf]
    %v723 = vld [vmem:[%s2 + $0x2d0] sm:$0xf]
    %v724 = vld [vmem:[%s2 + $0x2d4] sm:$0xf]
    %v725 = vld [vmem:[%s2 + $0x2d8] sm:$0xf]
    %v726 = vld [vmem:[%s2 + $0x2dc] sm:$0xf]
    %v727 = vld [vmem:[%s2 + $0x2e0] sm:$0xf]
    %v728 = vld [vmem:[%s2 + $0x2e4] sm:$0xf]
    %v729 = vld [vmem:[%s2 + $0x2e8] sm:$0xf]
    %v730 = vld [vmem:[%s2 + $0x2ec] sm:$0xf]
    %v731 = vld [vmem:[%s2 + $0x2f0] sm:$0xf]
    %v732 = vld [vmem:[%s2 + $0x2f4] sm:$0xf]
    %v733 = vld [vmem:[%s2 + $0x2f8] sm:$0xf]
    %v734 = vld [vmem:[%s2 + $0x2fc] sm:$0xf]
    %v735 = vld [vmem:[%s2 + $0x300] sm:$0xf]
    %v736 = vld [vmem:[%s2 + $0x304] sm:$0xf]
    %v737 = vld [vmem:[%s2 + $0x308] sm:$0xf]
    %v738 = vld [vmem:[%s2 + $0x30c] sm:$0xf]
    %v739 = vld [vmem:[%s2 + $0x310] sm:$0xf]
    %v740 = vld [vmem:[%s2 + $0x314] sm:$0xf]
    %v741 = vld [vmem:[%s2 + $0x318] sm:$0xf]
    %v742 = vld [vmem:[%s2 + $0x31c] sm:$0xf]
    %v743 = vld [vmem:[%s2 + $0x320] sm:$0xf]
    %v744 = vld [vmem:[%s2 + $0x324] sm:$0xf]
    %v745 = vld [vmem:[%s2 + $0x328] sm:$0xf]
    %v746 = vld [vmem:[%s2 + $0x32c] sm:$0xf]
    %v747 = vld [vmem:[%s2 + $0x330] sm:$0xf]
    %v748 = vld [vmem:[%s2 + $0x334] sm:$0xf]
    %v749 = vld [vmem:[%s2 + $0x338] sm:$0xf]
    %v750 = vld [vmem:[%s2 + $0x33c] sm:$0xf]
    %v751 = vld [vmem:[%s2 + $0x340] sm:$0xf]
    %v752 = vld [vmem:[%s2 + $0x344] sm:$0xf]
    %v753 = vld [vmem:[%s2 + $0x348] sm:$0xf]
    %v754 = vld [vmem:[%s2 + $0x34c] sm:$0xf]
    %v755 = vld [vmem:[%s2 + $0x350] sm:$0xf]
    %v756 = vld [vmem:[%s2 + $0x354] sm:$0xf]
    %v757 = vld [vmem:[%s2 + $0x358] sm:$0xf]
    %v758 = vld [vmem:[%s2 + $0x35c] sm:$0xf]
    %v759 = vld [vmem:[%s2 + $0x360] sm:$0xf]
    %v760 = vld [vmem:[%s2 + $0x364] sm:$0xf]
    %v761 = vld [vmem:[%s2 + $0x368] sm:$0xf]
    %v762 = vld [vmem:[%s2 + $0x36c] sm:$0xf]
    %v763 = vld [vmem:[%s2 + $0x370] sm:$0xf]
    %v764 = vlaneseq
    %v765 = vshrl.u32 %v764, 7
    %v766 = vsub.s32 0, %v765
    %v767 = vrot.slane %v26, %v766
    %v893 = vunpack.c.l.b16 %v639
    %v894 = vunpack.c.l.b16 %v640
    %v895 = vunpack.c.l.b16 %v641
    %v896 = vunpack.c.l.b16 %v642
    %v897 = vunpack.c.l.b16 %v643
    %v898 = vunpack.c.l.b16 %v644
    %v899 = vunpack.c.l.b16 %v645
    %v900 = vunpack.c.l.b16 %v646
    %v901 = vunpack.c.l.b16 %v647
    %v902 = vunpack.c.l.b16 %v648
    %v903 = vunpack.c.l.b16 %v649
    %v904 = vunpack.c.l.b16 %v650
    %v905 = vunpack.c.l.b16 %v651
    %v906 = vunpack.c.l.b16 %v652
    %v907 = vunpack.c.l.b16 %v653
    %v908 = vunpack.c.l.b16 %v654
    %v909 = vunpack.c.l.b16 %v655
    %v910 = vunpack.c.l.b16 %v656
    %v911 = vunpack.c.l.b16 %v657
    %v912 = vunpack.c.l.b16 %v658
    %v913 = vunpack.c.l.b16 %v659
    %v914 = vunpack.c.l.b16 %v660
    %v915 = vunpack.c.l.b16 %v661
    %v916 = vunpack.c.l.b16 %v662
    %v917 = vunpack.c.l.b16 %v663
    %v918 = vunpack.c.l.b16 %v664
    %v919 = vunpack.c.l.b16 %v665
    %v920 = vunpack.c.l.b16 %v666
    %v921 = vunpack.c.l.b16 %v667
    %v922 = vunpack.c.l.b16 %v668
    %v923 = vunpack.c.l.b16 %v669
    %v924 = vunpack.c.l.b16 %v670
    %v925 = vunpack.c.l.b16 %v671
    %v926 = vunpack.c.l.b16 %v672
    %v927 = vunpack.c.l.b16 %v673
    %v928 = vunpack.c.l.b16 %v674
    %v929 = vunpack.c.l.b16 %v675
    %v930 = vunpack.c.l.b16 %v676
    %v931 = vunpack.c.l.b16 %v677
    %v932 = vunpack.c.l.b16 %v678
    %v933 = vunpack.c.l.b16 %v679
    %v934 = vunpack.c.l.b16 %v680
    %v935 = vunpack.c.l.b16 %v681
    %v936 = vunpack.c.l.b16 %v682
    %v937 = vunpack.c.l.b16 %v683
    %v938 = vunpack.c.l.b16 %v684
    %v939 = vunpack.c.l.b16 %v685
    %v940 = vunpack.c.l.b16 %v686
    %v941 = vunpack.c.l.b16 %v687
    %v942 = vunpack.c.l.b16 %v688
    %v943 = vunpack.c.l.b16 %v689
    %v944 = vunpack.c.l.b16 %v690
    %v945 = vunpack.c.l.b16 %v691
    %v946 = vunpack.c.l.b16 %v692
    %v947 = vunpack.c.l.b16 %v693
    %v948 = vunpack.c.l.b16 %v694
    %v949 = vunpack.c.l.b16 %v695
    %v950 = vunpack.c.l.b16 %v696
    %v951 = vunpack.c.l.b16 %v697
    %v952 = vunpack.c.l.b16 %v698
    %v953 = vunpack.c.l.b16 %v699
    %v954 = vunpack.c.l.b16 %v700
    %v955 = vunpack.c.l.b16 %v701
    %v956 = vunpack.c.l.b16 %v702
    %v957 = vunpack.c.l.b16 %v703
    %v958 = vunpack.c.l.b16 %v704
    %v959 = vunpack.c.l.b16 %v705
    %v960 = vunpack.c.l.b16 %v706
    %v961 = vunpack.c.l.b16 %v707
    %v962 = vunpack.c.l.b16 %v708
    %v963 = vunpack.c.l.b16 %v709
    %v964 = vunpack.c.l.b16 %v710
    %v965 = vunpack.c.l.b16 %v711
    %v966 = vunpack.c.l.b16 %v712
    %v967 = vunpack.c.l.b16 %v713
    %v968 = vunpack.c.l.b16 %v714
    %v969 = vunpack.c.l.b16 %v715
    %v970 = vunpack.c.l.b16 %v716
    %v971 = vunpack.c.l.b16 %v717
    %v972 = vunpack.c.l.b16 %v718
    %v973 = vunpack.c.l.b16 %v719
    %v974 = vunpack.c.l.b16 %v720
    %v975 = vunpack.c.l.b16 %v721
    %v976 = vunpack.c.l.b16 %v722
    %v977 = vunpack.c.l.b16 %v723
    %v978 = vunpack.c.l.b16 %v724
    %v979 = vunpack.c.l.b16 %v725
    %v980 = vunpack.c.l.b16 %v726
    %v981 = vunpack.c.l.b16 %v727
    %v982 = vunpack.c.l.b16 %v728
    %v983 = vunpack.c.l.b16 %v729
    %v984 = vunpack.c.l.b16 %v730
    %v985 = vunpack.c.l.b16 %v731
    %v986 = vunpack.c.l.b16 %v732
    %v987 = vunpack.c.l.b16 %v733
    %v988 = vunpack.c.l.b16 %v734
    %v989 = vunpack.c.l.b16 %v735
    %v990 = vunpack.c.l.b16 %v736
    %v991 = vunpack.c.l.b16 %v737
    %v992 = vunpack.c.l.b16 %v738
    %v993 = vunpack.c.l.b16 %v739
    %v994 = vunpack.c.l.b16 %v740
    %v995 = vunpack.c.l.b16 %v741
    %v996 = vunpack.c.l.b16 %v742
    %v997 = vunpack.c.l.b16 %v743
    %v998 = vunpack.c.l.b16 %v744
    %v999 = vunpack.c.l.b16 %v745
    %v1000 = vunpack.c.l.b16 %v746
    %v1001 = vunpack.c.l.b16 %v747
    %v1002 = vunpack.c.l.b16 %v748
    %v1003 = vunpack.c.l.b16 %v749
    %v1004 = vunpack.c.l.b16 %v750
    %v1005 = vunpack.c.l.b16 %v751
    %v1006 = vunpack.c.l.b16 %v752
    %v1007 = vunpack.c.l.b16 %v753
    %v1008 = vunpack.c.l.b16 %v754
    %v1009 = vunpack.c.l.b16 %v755
    %v1010 = vunpack.c.l.b16 %v756
    %v1011 = vunpack.c.l.b16 %v757
    %v1012 = vunpack.c.l.b16 %v758
    %v1013 = vunpack.c.l.b16 %v759
    %v1014 = vunpack.c.l.b16 %v760
    %v1015 = vunpack.c.l.b16 %v761
    %v1016 = vunpack.c.l.b16 %v762
    %v1017 = vunpack.c.l.b16 %v763
    %v1018 = vpack.c.b16 %v894, %v893
    %v1019 = vpack.c.b16 %v896, %v895
    %v1020 = vpack.c.b16 %v898, %v897
    %v1021 = vpack.c.b16 %v900, %v899
    %v1022 = vpack.c.b16 %v902, %v901
    %v1023 = vpack.c.b16 %v904, %v903
    %v1024 = vpack.c.b16 %v906, %v905
    %v1025 = vpack.c.b16 %v908, %v907
    %v1026 = vpack.c.b16 %v910, %v909
    %v1027 = vpack.c.b16 %v912, %v911
    %v1028 = vpack.c.b16 %v914, %v913
    %v1029 = vpack.c.b16 %v916, %v915
    %v1030 = vpack.c.b16 %v918, %v917
    %v1031 = vpack.c.b16 %v920, %v919
    %v1032 = vpack.c.b16 %v922, %v921
    %v1033 = vpack.c.b16 %v924, %v923
    %v1034 = vpack.c.b16 %v926, %v925
    %v1035 = vpack.c.b16 %v928, %v927
    %v1036 = vpack.c.b16 %v930, %v929
    %v1037 = vpack.c.b16 %v932, %v931
    %v1038 = vpack.c.b16 %v934, %v933
    %v1039 = vpack.c.b16 %v936, %v935
    %v1040 = vpack.c.b16 %v938, %v937
    %v1041 = vpack.c.b16 %v940, %v939
    %v1042 = vpack.c.b16 %v942, %v941
    %v1043 = vpack.c.b16 %v944, %v943
    %v1044 = vpack.c.b16 %v946, %v945
    %v1045 = vpack.c.b16 %v948, %v947
    %v1046 = vpack.c.b16 %v950, %v949
    %v1047 = vpack.c.b16 %v952, %v951
    %v1048 = vpack.c.b16 %v954, %v953
    %v1049 = vpack.c.b16 %v956, %v955
    %v1050 = vpack.c.b16 %v958, %v957
    %v1051 = vpack.c.b16 %v960, %v959
    %v1052 = vpack.c.b16 %v962, %v961
    %v1053 = vpack.c.b16 %v964, %v963
    %v1054 = vpack.c.b16 %v966, %v965
    %v1055 = vpack.c.b16 %v968, %v967
    %v1056 = vpack.c.b16 %v970, %v969
    %v1057 = vpack.c.b16 %v972, %v971
    %v1058 = vpack.c.b16 %v974, %v973
    %v1059 = vpack.c.b16 %v976, %v975
    %v1060 = vpack.c.b16 %v978, %v977
    %v1061 = vpack.c.b16 %v980, %v979
    %v1062 = vpack.c.b16 %v982, %v981
    %v1063 = vpack.c.b16 %v984, %v983
    %v1064 = vpack.c.b16 %v986, %v985
    %v1065 = vpack.c.b16 %v988, %v987
    %v1066 = vpack.c.b16 %v990, %v989
    %v1067 = vpack.c.b16 %v992, %v991
    %v1068 = vpack.c.b16 %v994, %v993
    %v1069 = vpack.c.b16 %v996, %v995
    %v1070 = vpack.c.b16 %v998, %v997
    %v1071 = vpack.c.b16 %v1000, %v999
    %v1072 = vpack.c.b16 %v1002, %v1001
    %v1073 = vpack.c.b16 %v1004, %v1003
    %v1074 = vpack.c.b16 %v1006, %v1005
    %v1075 = vpack.c.b16 %v1008, %v1007
    %v1076 = vpack.c.b16 %v1010, %v1009
    %v1077 = vpack.c.b16 %v1012, %v1011
    %v1078 = vpack.c.b16 %v1014, %v1013
    %v1079 = vpack.c.b16 %v1016, %v1015
    %v1080 = vpack.c.b16 %v1017, %v1017
    %vm1143 = vcmask 850944
    %v1145 = vsel %vm1143, %v638, 0
    %vm1147 = vcmask 1043456
    %v1149 = vsel %vm1147, %v1080, 0
    %1151 = vmatprep.subr.bf16.mxu0 0
    %1152 = vmatpush1.bf16.msra.mxu0 %v1025
    %1153 = vmatprep.subr.bf16.mxu0 0
    %1154 = vmatpush1.bf16.msra.mxu0 %v1024
    %1155 = vmatprep.subr.bf16.mxu0 0
    %1156 = vmatpush1.bf16.msra.mxu0 %v1023
    %1157 = vmatprep.subr.bf16.mxu0 0
    %1158 = vmatpush1.bf16.msra.mxu0 %v1022
    %1159 = vmatprep.subr.bf16.mxu0 0
    %1160 = vmatpush1.bf16.msra.mxu0 %v1021
    %1161 = vmatprep.subr.bf16.mxu0 0
    %1162 = vmatpush1.bf16.msra.mxu0 %v1020
    %1163 = vmatprep.subr.bf16.mxu0 0
    %1164 = vmatpush1.bf16.msra.mxu0 %v1019
    %1165 = vmatprep.subr.bf16.mxu0 0
    %1166 = vmatpush1.bf16.msra.mxu0 %v1018
    %1167 = vmatprep.subr.bf16.mxu0 0
    %1168 = vmatpush2.bf16.msra.mxu0 %v1033
    %1169 = vmatprep.subr.bf16.mxu0 0
    %1170 = vmatpush2.bf16.msra.mxu0 %v1032
    %1171 = vmatprep.subr.bf16.mxu0 0
    %1172 = vmatpush2.bf16.msra.mxu0 %v1031
    %1173 = vmatprep.subr.bf16.mxu0 0
    %1174 = vmatpush2.bf16.msra.mxu0 %v1030
    %1175 = vmatprep.subr.bf16.mxu0 0
    %1176 = vmatpush2.bf16.msra.mxu0 %v1029
    %1177 = vmatprep.subr.bf16.mxu0 0
    %1178 = vmatpush2.bf16.msra.mxu0 %v1028
    %1179 = vmatprep.subr.bf16.mxu0 0
    %1180 = vmatpush2.bf16.msra.mxu0 %v1027
    %1181 = vmatprep.subr.bf16.mxu0 0
    %1182 = vmatpush2.bf16.msra.mxu0 %v1026
    %1183 = vmatprep.mubr.bf16.mxu0 %v632
    %1184 = vmatmul.mubr.bf16.gmra.mxu0 %v631
    %v1185 = vpop.f32.mrf.mxu0
    %v1186 = vadd.f32 %v767, %v1185
    %v1187 = vpop.f32.mrf.mxu0
    %v1188 = vpop.f32.mrf.mxu0
    %v1189 = vpop.f32.mrf.mxu0
    %1190 = vdwg.mxu0
    %1191 = vmatprep.subr.bf16.mxu0 0
    %1192 = vmatpush1.bf16.msra.mxu0 %v1041
    %1193 = vmatprep.subr.bf16.mxu0 0
    %1194 = vmatpush1.bf16.msra.mxu0 %v1040
    %1195 = vmatprep.subr.bf16.mxu0 0
    %1196 = vmatpush1.bf16.msra.mxu0 %v1039
    %1197 = vmatprep.subr.bf16.mxu0 0
    %1198 = vmatpush1.bf16.msra.mxu0 %v1038
    %1199 = vmatprep.subr.bf16.mxu0 0
    %1200 = vmatpush1.bf16.msra.mxu0 %v1037
    %1201 = vmatprep.subr.bf16.mxu0 0
    %1202 = vmatpush1.bf16.msra.mxu0 %v1036
    %1203 = vmatprep.subr.bf16.mxu0 0
    %1204 = vmatpush1.bf16.msra.mxu0 %v1035
    %1205 = vmatprep.subr.bf16.mxu0 0
    %1206 = vmatpush1.bf16.msra.mxu0 %v1034
    %1207 = vmatprep.subr.bf16.mxu0 0
    %1208 = vmatpush2.bf16.msra.mxu0 %v1049
    %1209 = vmatprep.subr.bf16.mxu0 0
    %1210 = vmatpush2.bf16.msra.mxu0 %v1048
    %1211 = vmatprep.subr.bf16.mxu0 0
    %1212 = vmatpush2.bf16.msra.mxu0 %v1047
    %1213 = vmatprep.subr.bf16.mxu0 0
    %1214 = vmatpush2.bf16.msra.mxu0 %v1046
    %1215 = vmatprep.subr.bf16.mxu0 0
    %1216 = vmatpush2.bf16.msra.mxu0 %v1045
    %1217 = vmatprep.subr.bf16.mxu0 0
    %1218 = vmatpush2.bf16.msra.mxu0 %v1044
    %1219 = vmatprep.subr.bf16.mxu0 0
    %1220 = vmatpush2.bf16.msra.mxu0 %v1043
    %1221 = vmatprep.subr.bf16.mxu0 0
    %1222 = vmatpush2.bf16.msra.mxu0 %v1042
    %1223 = vmatprep.mubr.bf16.mxu0 %v634
    %1224 = vmatmul.mubr.bf16.gmra.mxu0 %v633
    %v1225 = vpop.f32.mrf.mxu0
    %v1226 = vadd.f32 %v1186, %v1225
    %v1227 = vpop.f32.mrf.mxu0
    %v1228 = vpop.f32.mrf.mxu0
    %v1229 = vpop.f32.mrf.mxu0
    %1230 = vdwg.mxu0
    %1231 = vmatprep.subr.bf16.mxu0 0
    %1232 = vmatpush1.bf16.msra.mxu0 %v1057
    %1233 = vmatprep.subr.bf16.mxu0 0
    %1234 = vmatpush1.bf16.msra.mxu0 %v1056
    %1235 = vmatprep.subr.bf16.mxu0 0
    %1236 = vmatpush1.bf16.msra.mxu0 %v1055
    %1237 = vmatprep.subr.bf16.mxu0 0
    %1238 = vmatpush1.bf16.msra.mxu0 %v1054
    %1239 = vmatprep.subr.bf16.mxu0 0
    %1240 = vmatpush1.bf16.msra.mxu0 %v1053
    %1241 = vmatprep.subr.bf16.mxu0 0
    %1242 = vmatpush1.bf16.msra.mxu0 %v1052
    %1243 = vmatprep.subr.bf16.mxu0 0
    %1244 = vmatpush1.bf16.msra.mxu0 %v1051
    %1245 = vmatprep.subr.bf16.mxu0 0
    %1246 = vmatpush1.bf16.msra.mxu0 %v1050
    %1247 = vmatprep.subr.bf16.mxu0 0
    %1248 = vmatpush2.bf16.msra.mxu0 %v1065
    %1249 = vmatprep.subr.bf16.mxu0 0
    %1250 = vmatpush2.bf16.msra.mxu0 %v1064
    %1251 = vmatprep.subr.bf16.mxu0 0
    %1252 = vmatpush2.bf16.msra.mxu0 %v1063
    %1253 = vmatprep.subr.bf16.mxu0 0
    %1254 = vmatpush2.bf16.msra.mxu0 %v1062
    %1255 = vmatprep.subr.bf16.mxu0 0
    %1256 = vmatpush2.bf16.msra.mxu0 %v1061
    %1257 = vmatprep.subr.bf16.mxu0 0
    %1258 = vmatpush2.bf16.msra.mxu0 %v1060
    %1259 = vmatprep.subr.bf16.mxu0 0
    %1260 = vmatpush2.bf16.msra.mxu0 %v1059
    %1261 = vmatprep.subr.bf16.mxu0 0
    %1262 = vmatpush2.bf16.msra.mxu0 %v1058
    %1263 = vmatprep.mubr.bf16.mxu0 %v636
    %1264 = vmatmul.mubr.bf16.gmra.mxu0 %v635
    %v1265 = vpop.f32.mrf.mxu0
    %v1266 = vadd.f32 %v1226, %v1265
    %v1267 = vpop.f32.mrf.mxu0
    %v1268 = vpop.f32.mrf.mxu0
    %v1269 = vpop.f32.mrf.mxu0
    %1270 = vdwg.mxu0
    %1271 = vmatprep.subr.bf16.mxu0 0
    %1272 = vmatpush1.bf16.msra.mxu0 %v1073
    %1273 = vmatprep.subr.bf16.mxu0 0
    %1274 = vmatpush1.bf16.msra.mxu0 %v1072
    %1275 = vmatprep.subr.bf16.mxu0 0
    %1276 = vmatpush1.bf16.msra.mxu0 %v1071
    %1277 = vmatprep.subr.bf16.mxu0 0
    %1278 = vmatpush1.bf16.msra.mxu0 %v1070
    %1279 = vmatprep.subr.bf16.mxu0 0
    %1280 = vmatpush1.bf16.msra.mxu0 %v1069
    %1281 = vmatprep.subr.bf16.mxu0 0
    %1282 = vmatpush1.bf16.msra.mxu0 %v1068
    %1283 = vmatprep.subr.bf16.mxu0 0
    %1284 = vmatpush1.bf16.msra.mxu0 %v1067
    %1285 = vmatprep.subr.bf16.mxu0 0
    %1286 = vmatpush1.bf16.msra.mxu0 %v1066
    %1287 = vmatprep.subr.bf16.mxu0 0
    %1288 = vmatpush2.bf16.msra.mxu0 0
    %1289 = vmatprep.subr.bf16.mxu0 0
    %1290 = vmatpush2.bf16.msra.mxu0 %v1149
    %1291 = vmatprep.subr.bf16.mxu0 0
    %1292 = vmatpush2.bf16.msra.mxu0 %v1079
    %1293 = vmatprep.subr.bf16.mxu0 0
    %1294 = vmatpush2.bf16.msra.mxu0 %v1078
    %1295 = vmatprep.subr.bf16.mxu0 0
    %1296 = vmatpush2.bf16.msra.mxu0 %v1077
    %1297 = vmatprep.subr.bf16.mxu0 0
    %1298 = vmatpush2.bf16.msra.mxu0 %v1076
    %1299 = vmatprep.subr.bf16.mxu0 0
    %1300 = vmatpush2.bf16.msra.mxu0 %v1075
    %1301 = vmatprep.subr.bf16.mxu0 0
    %1302 = vmatpush2.bf16.msra.mxu0 %v1074
    %1303 = vmatprep.mubr.bf16.mxu0 %v1145
    %1304 = vmatmul.mubr.bf16.gmra.mxu0 %v637
    %v1305 = vpop.f32.mrf.mxu0
    %v1306 = vadd.f32 %v1266, %v1305
    %v1307 = vpop.f32.mrf.mxu0
    %v1308 = vpop.f32.mrf.mxu0
    %v1309 = vpop.f32.mrf.mxu0
    %1310 = vdwg.mxu0
    %v1311 = vmax.f32 %v1306, 0.0
    %v1312 = vpack.c.bf16 %v584, %v584
    %v1313 = vld [vmem:[%s3] sm:$0xf]
    %v1314 = vld [vmem:[%s3 + $0x4] sm:$0xf]
    %v1315 = vld [vmem:[%s3 + $0x8] sm:$0xf]
    %v1316 = vld [vmem:[%s3 + $0xc] sm:$0xf]
    %v1317 = vlaneseq
    %v1318 = vshrl.u32 %v1317, 7
    %v1319 = vsub.s32 0, %v1318
    %v1320 = vrot.slane %v27, %v1319
    %v1325 = vunpack.c.l.b16 %v1313
    %v1326 = vunpack.c.l.b16 %v1314
    %v1327 = vunpack.c.l.b16 %v1315
    %v1328 = vunpack.c.l.b16 %v1316
    %v1329 = vpack.c.b16 %v1326, %v1325
    %v1330 = vpack.c.b16 %v1328, %v1327
    %vm1333 = vcmask 261120
    %v1335 = vsel %vm1333, %v1312, 0
    %1337 = vmatprep.subr.bf16.mxu0 0
    %1338 = vmatpush1.bf16.msra.mxu0 0
    %1339 = vmatprep.subr.bf16.mxu0 0
    %1340 = vmatpush1.bf16.msra.mxu0 0
    %1341 = vmatprep.subr.bf16.mxu0 0
    %1342 = vmatpush1.bf16.msra.mxu0 0
    %1343 = vmatprep.subr.bf16.mxu0 0
    %1344 = vmatpush1.bf16.msra.mxu0 0
    %1345 = vmatprep.subr.bf16.mxu0 0
    %1346 = vmatpush1.bf16.msra.mxu0 0
    %1347 = vmatprep.subr.bf16.mxu0 0
    %1348 = vmatpush1.bf16.msra.mxu0 0
    %1349 = vmatprep.subr.bf16.mxu0 0
    %1350 = vmatpush1.bf16.msra.mxu0 %v1330
    %1351 = vmatprep.subr.bf16.mxu0 0
    %1352 = vmatpush1.bf16.msra.mxu0 %v1329
    %1353 = vmatprep.subr.bf16.mxu0 0
    %1354 = vmatpush2.bf16.msra.mxu0 0
    %1355 = vmatprep.subr.bf16.mxu0 0
    %1356 = vmatpush2.bf16.msra.mxu0 0
    %1357 = vmatprep.subr.bf16.mxu0 0
    %1358 = vmatpush2.bf16.msra.mxu0 0
    %1359 = vmatprep.subr.bf16.mxu0 0
    %1360 = vmatpush2.bf16.msra.mxu0 0
    %1361 = vmatprep.subr.bf16.mxu0 0
    %1362 = vmatpush2.bf16.msra.mxu0 0
    %1363 = vmatprep.subr.bf16.mxu0 0
    %1364 = vmatpush2.bf16.msra.mxu0 0
    %1365 = vmatprep.subr.bf16.mxu0 0
    %1366 = vmatpush2.bf16.msra.mxu0 0
    %1367 = vmatprep.subr.bf16.mxu0 0
    %1368 = vmatpush2.bf16.msra.mxu0 0
    %1369 = vmatprep.mubr.bf16.mxu0 0
    %1370 = vmatmul.mubr.bf16.gmra.mxu0 %v1335
    %v1371 = vpop.f32.mrf.mxu0
    %v1372 = vadd.f32 %v1320, %v1371
    %v1373 = vpop.f32.mrf.mxu0
    %v1374 = vpop.f32.mrf.mxu0
    %v1375 = vpop.f32.mrf.mxu0
    %1376 = vdwg.mxu0
    %v1377 = vpack.c.bf16 %v1311, %v1311
    %v1378 = vld [vmem:[%s3 + $0x10] sm:$0xf]
    %v1379 = vld [vmem:[%s3 + $0x14] sm:$0xf]
    %v1380 = vld [vmem:[%s3 + $0x18] sm:$0xf]
    %v1381 = vld [vmem:[%s3 + $0x1c] sm:$0xf]
    %v1382 = vlaneseq
    %v1383 = vshrl.u32 %v1382, 7
    %v1384 = vsub.s32 0, %v1383
    %v1385 = vrot.slane %v28, %v1384
    %v1390 = vunpack.c.l.b16 %v1378
    %v1391 = vunpack.c.l.b16 %v1379
    %v1392 = vunpack.c.l.b16 %v1380
    %v1393 = vunpack.c.l.b16 %v1381
    %v1394 = vpack.c.b16 %v1391, %v1390
    %v1395 = vpack.c.b16 %v1393, %v1392
    %v1399 = vsel %vm1333, %v1377, 0
    %1401 = vmatprep.subr.bf16.mxu0 0
    %1402 = vmatpush1.bf16.msra.mxu0 0
    %1403 = vmatprep.subr.bf16.mxu0 0
    %1404 = vmatpush1.bf16.msra.mxu0 0
    %1405 = vmatprep.subr.bf16.mxu0 0
    %1406 = vmatpush1.bf16.msra.mxu0 0
    %1407 = vmatprep.subr.bf16.mxu0 0
    %1408 = vmatpush1.bf16.msra.mxu0 0
    %1409 = vmatprep.subr.bf16.mxu0 0
    %1410 = vmatpush1.bf16.msra.mxu0 0
    %1411 = vmatprep.subr.bf16.mxu0 0
    %1412 = vmatpush1.bf16.msra.mxu0 0
    %1413 = vmatprep.subr.bf16.mxu0 0
    %1414 = vmatpush1.bf16.msra.mxu0 %v1395
    %1415 = vmatprep.subr.bf16.mxu0 0
    %1416 = vmatpush1.bf16.msra.mxu0 %v1394
    %1417 = vmatprep.subr.bf16.mxu0 0
    %1418 = vmatpush2.bf16.msra.mxu0 0
    %1419 = vmatprep.subr.bf16.mxu0 0
    %1420 = vmatpush2.bf16.msra.mxu0 0
    %1421 = vmatprep.subr.bf16.mxu0 0
    %1422 = vmatpush2.bf16.msra.mxu0 0
    %1423 = vmatprep.subr.bf16.mxu0 0
    %1424 = vmatpush2.bf16.msra.mxu0 0
    %1425 = vmatprep.subr.bf16.mxu0 0
    %1426 = vmatpush2.bf16.msra.mxu0 0
    %1427 = vmatprep.subr.bf16.mxu0 0
    %1428 = vmatpush2.bf16.msra.mxu0 0
    %1429 = vmatprep.subr.bf16.mxu0 0
    %1430 = vmatpush2.bf16.msra.mxu0 0
    %1431 = vmatprep.subr.bf16.mxu0 0
    %1432 = vmatpush2.bf16.msra.mxu0 0
    %1433 = vmatprep.mubr.bf16.mxu0 0
    %1434 = vmatmul.mubr.bf16.gmra.mxu0 %v1399
    %v1435 = vpop.f32.mrf.mxu0
    %v1436 = vadd.f32 %v1385, %v1435
    %v1437 = vpop.f32.mrf.mxu0
    %v1438 = vpop.f32.mrf.mxu0
    %v1439 = vpop.f32.mrf.mxu0
    %1440 = vdwg.mxu0
    %1442 = vrot.lane.b32.xlu0 %v1436, 32
    %v1443 = vpop.permute.xlu0 %1442
    %v1445 = vsel %vm1333, %v1372, %v1443
    %v1446 = vpack.c.bf16 %v1445, %v1445
    %v1447 = vld [vmem:[%s3 + $0x20] sm:$0xf]
    %v1448 = vld [vmem:[%s3 + $0x24] sm:$0xf]
    %v1449 = vld [vmem:[%s3 + $0x28] sm:$0xf]
    %v1450 = vld [vmem:[%s3 + $0x2c] sm:$0xf]
    %v1451 = vld [vmem:[%s3 + $0x30] sm:$0xf]
    %v1452 = vld [vmem:[%s3 + $0x34] sm:$0xf]
    %v1453 = vld [vmem:[%s3 + $0x38] sm:$0xf]
    %v1454 = vld [vmem:[%s3 + $0x3c] sm:$0xf]
    %v1455 = vlaneseq
    %v1456 = vshrl.u32 %v1455, 7
    %v1457 = vsub.s32 0, %v1456
    %v1458 = vrot.slane %v29, %v1457
    %v1467 = vunpack.c.l.b16 %v1447
    %v1468 = vunpack.c.l.b16 %v1448
    %v1469 = vunpack.c.l.b16 %v1449
    %v1470 = vunpack.c.l.b16 %v1450
    %v1471 = vunpack.c.l.b16 %v1451
    %v1472 = vunpack.c.l.b16 %v1452
    %v1473 = vunpack.c.l.b16 %v1453
    %v1474 = vunpack.c.l.b16 %v1454
    %v1475 = vpack.c.b16 %v1468, %v1467
    %v1476 = vpack.c.b16 %v1470, %v1469
    %v1477 = vpack.c.b16 %v1472, %v1471
    %v1478 = vpack.c.b16 %v1474, %v1473
    %vm1483 = vcmask 523264
    %v1485 = vsel %vm1483, %v1446, 0
    %1487 = vmatprep.subr.bf16.mxu0 0
    %1488 = vmatpush1.bf16.msra.mxu0 0
    %1489 = vmatprep.subr.bf16.mxu0 0
    %1490 = vmatpush1.bf16.msra.mxu0 0
    %1491 = vmatprep.subr.bf16.mxu0 0
    %1492 = vmatpush1.bf16.msra.mxu0 0
    %1493 = vmatprep.subr.bf16.mxu0 0
    %1494 = vmatpush1.bf16.msra.mxu0 0
    %1495 = vmatprep.subr.bf16.mxu0 0
    %1496 = vmatpush1.bf16.msra.mxu0 %v1478
    %1497 = vmatprep.subr.bf16.mxu0 0
    %1498 = vmatpush1.bf16.msra.mxu0 %v1477
    %1499 = vmatprep.subr.bf16.mxu0 0
    %1500 = vmatpush1.bf16.msra.mxu0 %v1476
    %1501 = vmatprep.subr.bf16.mxu0 0
    %1502 = vmatpush1.bf16.msra.mxu0 %v1475
    %1503 = vmatprep.subr.bf16.mxu0 0
    %1504 = vmatpush2.bf16.msra.mxu0 0
    %1505 = vmatprep.subr.bf16.mxu0 0
    %1506 = vmatpush2.bf16.msra.mxu0 0
    %1507 = vmatprep.subr.bf16.mxu0 0
    %1508 = vmatpush2.bf16.msra.mxu0 0
    %1509 = vmatprep.subr.bf16.mxu0 0
    %1510 = vmatpush2.bf16.msra.mxu0 0
    %1511 = vmatprep.subr.bf16.mxu0 0
    %1512 = vmatpush2.bf16.msra.mxu0 0
    %1513 = vmatprep.subr.bf16.mxu0 0
    %1514 = vmatpush2.bf16.msra.mxu0 0
    %1515 = vmatprep.subr.bf16.mxu0 0
    %1516 = vmatpush2.bf16.msra.mxu0 0
    %1517 = vmatprep.subr.bf16.mxu0 0
    %1518 = vmatpush2.bf16.msra.mxu0 0
    %1519 = vmatprep.mubr.bf16.mxu0 0
    %1520 = vmatmul.mubr.bf16.gmra.mxu0 %v1485
    %v1521 = vpop.f32.mrf.mxu0
    %v1522 = vadd.f32 %v1458, %v1521
    %v1523 = vpop.f32.mrf.mxu0
    %v1524 = vpop.f32.mrf.mxu0
    %v1525 = vpop.f32.mrf.mxu0
    %1526 = vdwg.mxu0
    %v1528 = vrot.slane %v1372, 6
    %1529 = vrot.lane.b32.xlu0 %v1528, 96
    %v1530 = vpop.permute.xlu0 %1529
    %v1532 = vrot.slane %v1436, 4
    %1533 = vrot.lane.b32.xlu0 %v1532, 96
    %v1534 = vpop.permute.xlu0 %1533
    %vm1536 = vcmask 1041408
    %v1537 = vsel %vm1536, %v1522, %v1530
    %v1538 = vsel %vm1147, %v1537, %v1534
    %v1539 = vpack.c.bf16 %v1538, %v1538
    %v1540 = vld [vmem:[%s3 + $0x40] sm:$0xf]
    %v1541 = vld [vmem:[%s3 + $0x44] sm:$0xf]
    %v1542 = vld [vmem:[%s3 + $0x48] sm:$0xf]
    %v1543 = vld [vmem:[%s3 + $0x4c] sm:$0xf]
    %v1544 = vlaneseq
    %v1545 = vshrl.u32 %v1544, 7
    %v1546 = vsub.s32 0, %v1545
    %v1547 = vrot.slane %v30, %v1546
    %v1552 = vunpack.c.l.b16 %v1540
    %v1553 = vunpack.c.l.b16 %v1541
    %v1554 = vunpack.c.l.b16 %v1542
    %v1555 = vunpack.c.l.b16 %v1543
    %v1556 = vpack.c.b16 %v1553, %v1552
    %v1557 = vpack.c.b16 %v1555, %v1554
    %v1561 = vsel %vm1333, %v1539, 0
    %1563 = vmatprep.subr.bf16.mxu0 0
    %1564 = vmatpush1.bf16.msra.mxu0 0
    %1565 = vmatprep.subr.bf16.mxu0 0
    %1566 = vmatpush1.bf16.msra.mxu0 0
    %1567 = vmatprep.subr.bf16.mxu0 0
    %1568 = vmatpush1.bf16.msra.mxu0 0
    %1569 = vmatprep.subr.bf16.mxu0 0
    %1570 = vmatpush1.bf16.msra.mxu0 0
    %1571 = vmatprep.subr.bf16.mxu0 0
    %1572 = vmatpush1.bf16.msra.mxu0 0
    %1573 = vmatprep.subr.bf16.mxu0 0
    %1574 = vmatpush1.bf16.msra.mxu0 0
    %1575 = vmatprep.subr.bf16.mxu0 0
    %1576 = vmatpush1.bf16.msra.mxu0 %v1557
    %1577 = vmatprep.subr.bf16.mxu0 0
    %1578 = vmatpush1.bf16.msra.mxu0 %v1556
    %1579 = vmatprep.subr.bf16.mxu0 0
    %1580 = vmatpush2.bf16.msra.mxu0 0
    %1581 = vmatprep.subr.bf16.mxu0 0
    %1582 = vmatpush2.bf16.msra.mxu0 0
    %1583 = vmatprep.subr.bf16.mxu0 0
    %1584 = vmatpush2.bf16.msra.mxu0 0
    %1585 = vmatprep.subr.bf16.mxu0 0
    %1586 = vmatpush2.bf16.msra.mxu0 0
    %1587 = vmatprep.subr.bf16.mxu0 0
    %1588 = vmatpush2.bf16.msra.mxu0 0
    %1589 = vmatprep.subr.bf16.mxu0 0
    %1590 = vmatpush2.bf16.msra.mxu0 0
    %1591 = vmatprep.subr.bf16.mxu0 0
    %1592 = vmatpush2.bf16.msra.mxu0 0
    %1593 = vmatprep.subr.bf16.mxu0 0
    %1594 = vmatpush2.bf16.msra.mxu0 0
    %1595 = vmatprep.mubr.bf16.mxu0 0
    %1596 = vmatmul.mubr.bf16.gmra.mxu0 %v1561
    %v1597 = vpop.f32.mrf.mxu0
    %v1598 = vadd.f32 %v1547, %v1597
    %v1599 = vpop.f32.mrf.mxu0
    %v1600 = vpop.f32.mrf.mxu0
    %v1601 = vpop.f32.mrf.mxu0
    %1602 = vdwg.mxu0
    %v1603 = vtanh.pop %v1598
    %v1604 = vlaneseq
    %v1605 = vshrl.u32 %v1604, 7
    %v1606 = vsub.s32 0, %v1605
    %v1607 = vrot.slane %v34, %v1606
    %v1608 = vmul.f32 %v1603, %v1607
    %vm1609 = vcmask 259072
    %v1610 = vsel %vm1609, %v1608, 0.0
    %1611 = vadd.xlane.f32.xlu0 %v1610
    %v1612 = vpop.xlane.xlu0 %1611
    %v1613 = vlaneseq
    %v1614 = vshrl.u32 %v1613, 7
    %v1615 = vsub.s32 0, %v1614
    %v1616 = vrot.slane %v31, %v1615
    %v1617 = vadd.f32 %v1612, %v1616
    %v1619 = vrot.slane %v1617, 2
    %v1621 = vmax.f32 %v1617, %v1619
    %v1622 = vrot.slane %v1617, 4
    %v1624 = vmax.f32 %v1621, %v1622
    %v1625 = vsub.f32 %v1617, %v1624
    %v1626 = vmul.f32 %v1625, 1.442695
    %v1627 = vpow.pop %v1626
    %v1629 = vrot.slane %v1624, 6
    %v1631 = vsub.f32 %v1617, %v1629
    %v1632 = vmul.f32 %v1631, 1.442695
    %v1633 = vpow.pop %v1632
    %v1634 = vrot.slane %v1624, 4
    %v1636 = vsub.f32 %v1617, %v1634
    %v1637 = vmul.f32 %v1636, 1.442695
    %v1638 = vpow.pop %v1637
    %v1640 = vrot.slane %v1633, 2
    %v1642 = vadd.f32 %v1627, %v1640
    %v1644 = vrot.slane %v1638, 4
    %v1646 = vadd.f32 %v1642, %v1644
    %v1647 = vrcp.pop %v1646
    %v1648 = vmul.f32 %v1627, %v1647
    %1650 = vset.pattern.permute.xlu0 0
    %1651 = vperm.xlu0 %1650, %v1648
    %v1652 = vpop.permute.xlu0 %1651
    %v1654 = vmul.f32 %v1652, %v1522
    %v1656 = vrot.slane %v1647, 6
    %v1658 = vmul.f32 %v1633, %v1656
    %1660 = vset.pattern.permute.xlu0 0
    %1661 = vperm.xlu0 %1660, %v1658
    %v1662 = vpop.permute.xlu0 %1661
    %v1664 = vmul.f32 %v1662, %v1530
    %v1665 = vrot.slane %v1647, 4
    %v1667 = vmul.f32 %v1638, %v1665
    %1669 = vset.pattern.permute.xlu0 0
    %1670 = vperm.xlu0 %1669, %v1667
    %v1671 = vpop.permute.xlu0 %1670
    %v1673 = vmul.f32 %v1671, %v1534
    %v1675 = vrot.slane %v1664, 2
    %1676 = vrot.lane.b32.xlu0 %v1675, 32
    %v1677 = vpop.permute.xlu0 %1676
    %v1680 = vrot.slane %v1673, 4
    %1681 = vrot.lane.b32.xlu0 %v1680, 64
    %v1682 = vpop.permute.xlu0 %1681
    %v1684 = vsel %vm1333, %v1654, %v1677
    %v1685 = vsel %vm1483, %v1684, %v1682
    %v1686 = vpack.c.bf16 %v1685, %v1685
    %v1687 = vld [vmem:[%s3 + $0x50] sm:$0xf]
    %v1688 = vld [vmem:[%s3 + $0x54] sm:$0xf]
    %v1689 = vld [vmem:[%s3 + $0x58] sm:$0xf]
    %v1690 = vld [vmem:[%s3 + $0x5c] sm:$0xf]
    %v1691 = vld [vmem:[%s3 + $0x60] sm:$0xf]
    %v1692 = vld [vmem:[%s3 + $0x64] sm:$0xf]
    %v1693 = vld [vmem:[%s3 + $0x68] sm:$0xf]
    %v1694 = vld [vmem:[%s3 + $0x6c] sm:$0xf]
    %v1695 = vld [vmem:[%s3 + $0x70] sm:$0xf]
    %v1696 = vld [vmem:[%s3 + $0x74] sm:$0xf]
    %v1697 = vld [vmem:[%s3 + $0x78] sm:$0xf]
    %v1698 = vld [vmem:[%s3 + $0x7c] sm:$0xf]
    %v1699 = vlaneseq
    %v1700 = vshrl.u32 %v1699, 7
    %v1701 = vsub.s32 0, %v1700
    %v1702 = vrot.slane %v32, %v1701
    %v1715 = vunpack.c.l.b16 %v1687
    %v1716 = vunpack.c.l.b16 %v1688
    %v1717 = vunpack.c.l.b16 %v1689
    %v1718 = vunpack.c.l.b16 %v1690
    %v1719 = vunpack.c.l.b16 %v1691
    %v1720 = vunpack.c.l.b16 %v1692
    %v1721 = vunpack.c.l.b16 %v1693
    %v1722 = vunpack.c.l.b16 %v1694
    %v1723 = vunpack.c.l.b16 %v1695
    %v1724 = vunpack.c.l.b16 %v1696
    %v1725 = vunpack.c.l.b16 %v1697
    %v1726 = vunpack.c.l.b16 %v1698
    %v1727 = vpack.c.b16 %v1716, %v1715
    %v1728 = vpack.c.b16 %v1718, %v1717
    %v1729 = vpack.c.b16 %v1720, %v1719
    %v1730 = vpack.c.b16 %v1722, %v1721
    %v1731 = vpack.c.b16 %v1724, %v1723
    %v1732 = vpack.c.b16 %v1726, %v1725
    %vm1739 = vcmask 785408
    %v1741 = vsel %vm1739, %v1686, 0
    %1743 = vmatprep.subr.bf16.mxu0 0
    %1744 = vmatpush1.bf16.msra.mxu0 0
    %1745 = vmatprep.subr.bf16.mxu0 0
    %1746 = vmatpush1.bf16.msra.mxu0 0
    %1747 = vmatprep.subr.bf16.mxu0 0
    %1748 = vmatpush1.bf16.msra.mxu0 %v1732
    %1749 = vmatprep.subr.bf16.mxu0 0
    %1750 = vmatpush1.bf16.msra.mxu0 %v1731
    %1751 = vmatprep.subr.bf16.mxu0 0
    %1752 = vmatpush1.bf16.msra.mxu0 %v1730
    %1753 = vmatprep.subr.bf16.mxu0 0
    %1754 = vmatpush1.bf16.msra.mxu0 %v1729
    %1755 = vmatprep.subr.bf16.mxu0 0
    %1756 = vmatpush1.bf16.msra.mxu0 %v1728
    %1757 = vmatprep.subr.bf16.mxu0 0
    %1758 = vmatpush1.bf16.msra.mxu0 %v1727
    %1759 = vmatprep.subr.bf16.mxu0 0
    %1760 = vmatpush2.bf16.msra.mxu0 0
    %1761 = vmatprep.subr.bf16.mxu0 0
    %1762 = vmatpush2.bf16.msra.mxu0 0
    %1763 = vmatprep.subr.bf16.mxu0 0
    %1764 = vmatpush2.bf16.msra.mxu0 0
    %1765 = vmatprep.subr.bf16.mxu0 0
    %1766 = vmatpush2.bf16.msra.mxu0 0
    %1767 = vmatprep.subr.bf16.mxu0 0
    %1768 = vmatpush2.bf16.msra.mxu0 0
    %1769 = vmatprep.subr.bf16.mxu0 0
    %1770 = vmatpush2.bf16.msra.mxu0 0
    %1771 = vmatprep.subr.bf16.mxu0 0
    %1772 = vmatpush2.bf16.msra.mxu0 0
    %1773 = vmatprep.subr.bf16.mxu0 0
    %1774 = vmatpush2.bf16.msra.mxu0 0
    %1775 = vmatprep.mubr.bf16.mxu0 0
    %1776 = vmatmul.mubr.bf16.gmra.mxu0 %v1741
    %v1777 = vpop.f32.mrf.mxu0
    %v1778 = vadd.f32 %v1702, %v1777
    %v1779 = vpop.f32.mrf.mxu0
    %v1780 = vpop.f32.mrf.mxu0
    %v1781 = vpop.f32.mrf.mxu0
    %1782 = vdwg.mxu0
    %v1783 = vmax.f32 %v1778, 0.0
    %v1784 = vpack.c.bf16 %v1783, %v1783
    %v1785 = vld [vmem:[%s3 + $0x80] sm:$0xf]
    %v1786 = vld [vmem:[%s3 + $0x84] sm:$0xf]
    %v1787 = vld [vmem:[%s3 + $0x88] sm:$0xf]
    %v1788 = vld [vmem:[%s3 + $0x8c] sm:$0xf]
    %v1789 = vlaneseq
    %v1790 = vshrl.u32 %v1789, 7
    %v1791 = vsub.s32 0, %v1790
    %v1792 = vrot.slane %v33, %v1791
    %v1797 = vunpack.c.l.b16 %v1785
    %v1798 = vunpack.c.l.b16 %v1786
    %v1799 = vunpack.c.l.b16 %v1787
    %v1800 = vunpack.c.l.b16 %v1788
    %v1801 = vpack.c.b16 %v1798, %v1797
    %v1802 = vpack.c.b16 %v1800, %v1799
    %v1806 = vsel %vm1333, %v1784, 0
    %1808 = vmatprep.subr.bf16.mxu0 0
    %1809 = vmatpush1.bf16.msra.mxu0 0
    %1810 = vmatprep.subr.bf16.mxu0 0
    %1811 = vmatpush1.bf16.msra.mxu0 0
    %1812 = vmatprep.subr.bf16.mxu0 0
    %1813 = vmatpush1.bf16.msra.mxu0 0
    %1814 = vmatprep.subr.bf16.mxu0 0
    %1815 = vmatpush1.bf16.msra.mxu0 0
    %1816 = vmatprep.subr.bf16.mxu0 0
    %1817 = vmatpush1.bf16.msra.mxu0 0
    %1818 = vmatprep.subr.bf16.mxu0 0
    %1819 = vmatpush1.bf16.msra.mxu0 0
    %1820 = vmatprep.subr.bf16.mxu0 0
    %1821 = vmatpush1.bf16.msra.mxu0 %v1802
    %1822 = vmatprep.subr.bf16.mxu0 0
    %1823 = vmatpush1.bf16.msra.mxu0 %v1801
    %1824 = vmatprep.subr.bf16.mxu0 0
    %1825 = vmatpush2.bf16.msra.mxu0 0
    %1826 = vmatprep.subr.bf16.mxu0 0
    %1827 = vmatpush2.bf16.msra.mxu0 0
    %1828 = vmatprep.subr.bf16.mxu0 0
    %1829 = vmatpush2.bf16.msra.mxu0 0
    %1830 = vmatprep.subr.bf16.mxu0 0
    %1831 = vmatpush2.bf16.msra.mxu0 0
    %1832 = vmatprep.subr.bf16.mxu0 0
    %1833 = vmatpush2.bf16.msra.mxu0 0
    %1834 = vmatprep.subr.bf16.mxu0 0
    %1835 = vmatpush2.bf16.msra.mxu0 0
    %1836 = vmatprep.subr.bf16.mxu0 0
    %1837 = vmatpush2.bf16.msra.mxu0 0
    %1838 = vmatprep.subr.bf16.mxu0 0
    %1839 = vmatpush2.bf16.msra.mxu0 0
    %1840 = vmatprep.mubr.bf16.mxu0 0
    %1841 = vmatmul.mubr.bf16.gmra.mxu0 %v1806
    %v1842 = vpop.f32.mrf.mxu0
    %v1843 = vadd.f32 %v1792, %v1842
    %v1844 = vpop.f32.mrf.mxu0
    %v1845 = vpop.f32.mrf.mxu0
    %v1846 = vpop.f32.mrf.mxu0
    %1847 = vdwg.mxu0
    %vm1848 = vcmask 9216
    %v1849 = vsel %vm1848, %v1843, -inf
    %1850 = vmax.xlane.f32.xlu0 %v1849
    %v1851 = vpop.xlane.xlu0 %1850
    %v1852 = vsub.f32 %v1843, %v1851
    %v1853 = vmul.f32 %v1852, 1.442695
    %v1854 = vpow.pop %v1853
    %v1855 = vsel %vm1848, %v1854, 0.0
    %1856 = vadd.xlane.f32.xlu0 %v1855
    %v1857 = vpop.xlane.xlu0 %1856
    %v1858 = vrcp.pop %v1857
    %v1859 = vmul.f32 %v1854, %v1858
    %1860 = vst.msk [vmem:[#allocation2] sm:$0x3] %vm1848, %v1859
    %vm1861 = vcmask 254976
    %v1862 = vsel %vm1861, %v1522, 0.0
    %v1863 = vrot.slane %v1862, 4
    %v1864 = vadd.f32 %v1862, %v1863
    %v1865 = vrot.slane %v1864, 2
    %v1866 = vadd.f32 %v1864, %v1865
    %v1867 = vrot.slane %v1866, 1
    %v1868 = vadd.f32 %v1866, %v1867
    %v1869 = vrcp.pop 2.0
    %v1870 = vmul.f32 %v1868, %v1869
    %v1871 = vsub.f32 %v1522, %v1870
    %v1872 = vmul.f32 %v1871, %v1871
    %v1873 = vsel %vm1861, %v1872, 0.0
    %1874 = vadd.xlane.f32.xlu0 %v1873
    %v1875 = vpop.xlane.xlu0 %1874
    %v1876 = vrsqrt.pop %v1875
    %v1877 = vmul.f32 %v1875, %v1876
    %vm1878 = vcmp.eq.f32.partialorder %v1875, inf
    %v1879 = vsel %vm1878, %v1875, %v1877
    %vm1880 = vcmp.eq.f32.partialorder %v1875, 0.0
    %v1881 = vand.u32 %v1875, 2147483648
    %v1882 = vsel %vm1880, %v1881, %v1879
    %v1883 = vadd.f32 %v1882, 1e-06
    %v1884 = vrcp.pop %v1883
    %v1885 = vmul.f32 %v1871, %v1884
    %vm1886 = vcmask 517376
    %v1887 = vsel %vm1886, %v1372, 0.0
    %v1888 = vrot.slane %v1887, 4
    %v1889 = vadd.f32 %v1887, %v1888
    %v1890 = vrot.slane %v1889, 2
    %v1891 = vadd.f32 %v1889, %v1890
    %v1892 = vrot.slane %v1891, 1
    %v1893 = vadd.f32 %v1891, %v1892
    %v1894 = vmul.f32 %v1893, %v1869
    %v1895 = vsub.f32 %v1372, %v1894
    %v1896 = vmul.f32 %v1895, %v1895
    %1898 = vrot.lane.b32.xlu0 %v1896, 96
    %v1899 = vpop.permute.xlu0 %1898
    %v1901 = vsel %vm1861, %v1899, 0.0
    %1902 = vadd.xlane.f32.xlu0 %v1901
    %v1903 = vpop.xlane.xlu0 %1902
    %v1904 = vrsqrt.pop %v1903
    %v1905 = vmul.f32 %v1903, %v1904
    %vm1906 = vcmp.eq.f32.partialorder %v1903, inf
    %v1907 = vsel %vm1906, %v1903, %v1905
    %vm1908 = vcmp.eq.f32.partialorder %v1903, 0.0
    %v1909 = vand.u32 %v1903, 2147483648
    %v1910 = vsel %vm1908, %v1909, %v1907
    %v1911 = vadd.f32 %v1910, 1e-06
    %v1912 = vrcp.pop %v1911
    %v1913 = vmul.f32 %v1895, %v1912
    %v1914 = vsel %vm1886, %v1436, 0.0
    %v1915 = vrot.slane %v1914, 4
    %v1916 = vadd.f32 %v1914, %v1915
    %v1917 = vrot.slane %v1916, 2
    %v1918 = vadd.f32 %v1916, %v1917
    %v1919 = vrot.slane %v1918, 1
    %v1920 = vadd.f32 %v1918, %v1919
    %v1921 = vmul.f32 %v1920, %v1869
    %v1922 = vsub.f32 %v1436, %v1921
    %v1923 = vmul.f32 %v1922, %v1922
    %1925 = vrot.lane.b32.xlu0 %v1923, 96
    %v1926 = vpop.permute.xlu0 %1925
    %v1928 = vsel %vm1861, %v1926, 0.0
    %1929 = vadd.xlane.f32.xlu0 %v1928
    %v1930 = vpop.xlane.xlu0 %1929
    %v1931 = vrsqrt.pop %v1930
    %v1932 = vmul.f32 %v1930, %v1931
    %vm1933 = vcmp.eq.f32.partialorder %v1930, inf
    %v1934 = vsel %vm1933, %v1930, %v1932
    %vm1935 = vcmp.eq.f32.partialorder %v1930, 0.0
    %v1936 = vand.u32 %v1930, 2147483648
    %v1937 = vsel %vm1935, %v1936, %v1934
    %v1938 = vadd.f32 %v1937, 1e-06
    %v1939 = vrcp.pop %v1938
    %v1940 = vmul.f32 %v1922, %v1939
    %1942 = vrot.lane.b32.xlu0 %v1940, 32
    %v1943 = vpop.permute.xlu0 %1942
    %v1945 = vsel %vm1333, %v1885, %v1913
    %v1946 = vsel %vm1483, %v1945, %v1943
    %1947 = vxpose.xlu0.b32.start [1/16] %v1946, 128
    %1948 = vxpose.xlu0.b32.cont [2/16] 0.0, 128
    %1949 = vxpose.xlu0.b32.cont [3/16] 0.0, 128
    %1950 = vxpose.xlu0.b32.cont [4/16] 0.0, 128
    %1951 = vxpose.xlu0.b32.cont [5/16] 0.0, 128
    %1952 = vxpose.xlu0.b32.cont [6/16] 0.0, 128
    %1953 = vxpose.xlu0.b32.cont [7/16] 0.0, 128
    %1954 = vxpose.xlu0.b32.cont [8/16] 0.0, 128
    %1955 = vxpose.xlu0.b32.cont [9/16] 0.0, 128
    %1956 = vxpose.xlu0.b32.cont [10/16] 0.0, 128
    %1957 = vxpose.xlu0.b32.cont [11/16] 0.0, 128
    %1958 = vxpose.xlu0.b32.cont [12/16] 0.0, 128
    %1959 = vxpose.xlu0.b32.cont [13/16] 0.0, 128
    %1960 = vxpose.xlu0.b32.cont [14/16] 0.0, 128
    %1961 = vxpose.xlu0.b32.cont [15/16] 0.0, 128
    %1962 = vxpose.xlu0.b32.end [16/16] 0.0, 128
    %v1963 = vpop.trf.xlu0
    %v1964 = vpop.trf.xlu0
    %v1965 = vpop.trf.xlu0
    %v1966 = vpop.trf.xlu0
    %v1967 = vpop.trf.xlu0
    %v1968 = vpop.trf.xlu0
    %v1969 = vpop.trf.xlu0
    %v1970 = vpop.trf.xlu0
    %v1971 = vpop.trf.xlu0
    %v1972 = vpop.trf.xlu0
    %v1973 = vpop.trf.xlu0
    %v1974 = vpop.trf.xlu0
    %v1975 = vpop.trf.xlu0
    %v1976 = vpop.trf.xlu0
    %v1977 = vpop.trf.xlu0
    %v1978 = vpop.trf.xlu0
    %vm1979 = vcmask 15360
    %v1981 = vsel %vm1979, %v1963, 0
    %v1984 = vsel %vm1979, %v1964, 0
    %v1987 = vsel %vm1979, %v1965, 0
    %v1990 = vsel %vm1979, %v1966, 0
    %v1993 = vsel %vm1979, %v1967, 0
    %v1996 = vsel %vm1979, %v1968, 0
    %v1999 = vsel %vm1979, %v1969, 0
    %v2002 = vsel %vm1979, %v1970, 0
    %v2005 = vsel %vm1979, %v1971, 0
    %v2008 = vsel %vm1979, %v1972, 0
    %v2011 = vsel %vm1979, %v1973, 0
    %v2014 = vsel %vm1979, %v1974, 0
    %v2017 = vsel %vm1536, %v1946, 0
    %2019 = vmatprep.subr.mxu0 0.0
    %2020 = vmatpush1.msra.mxu0 0.0
    %2021 = vmatprep.subr.mxu0 0.0
    %2022 = vmatpush1.msra.mxu0 0.0
    %2023 = vmatprep.subr.mxu0 0.0
    %2024 = vmatpush1.msra.mxu0 0.0
    %2025 = vmatprep.subr.mxu0 0.0
    %2026 = vmatpush1.msra.mxu0 0.0
    %2027 = vmatprep.subr.mxu0 0.0
    %2028 = vmatpush1.msra.mxu0 0.0
    %2029 = vmatprep.subr.mxu0 0.0
    %2030 = vmatpush1.msra.mxu0 0.0
    %2031 = vmatprep.subr.mxu0 0.0
    %2032 = vmatpush1.msra.mxu0 0.0
    %2033 = vmatprep.subr.mxu0 0.0
    %2034 = vmatpush1.msra.mxu0 0.0
    %2035 = vmatprep.subr.mxu0 0.0
    %2036 = vmatpush1.msra.mxu0 0.0
    %2037 = vmatprep.subr.mxu0 0.0
    %2038 = vmatpush1.msra.mxu0 0.0
    %2039 = vmatprep.subr.mxu0 0.0
    %2040 = vmatpush1.msra.mxu0 0.0
    %2041 = vmatprep.subr.mxu0 0.0
    %2042 = vmatpush1.msra.mxu0 0.0
    %2043 = vmatprep.subr.mxu0 0.0
    %2044 = vmatpush1.msra.mxu0 0.0
    %2045 = vmatprep.subr.mxu0 0.0
    %2046 = vmatpush1.msra.mxu0 0.0
    %2047 = vmatprep.subr.mxu0 0.0
    %2048 = vmatpush1.msra.mxu0 0.0
    %2049 = vmatprep.subr.mxu0 0.0
    %2050 = vmatpush1.msra.mxu0 %v2017
    %2051 = vmatprep.subr.mxu0 0.0
    %2052 = vmatpush2.msra.mxu0 0.0
    %2053 = vmatprep.subr.mxu0 0.0
    %2054 = vmatpush2.msra.mxu0 0.0
    %2055 = vmatprep.subr.mxu0 0.0
    %2056 = vmatpush2.msra.mxu0 0.0
    %2057 = vmatprep.subr.mxu0 0.0
    %2058 = vmatpush2.msra.mxu0 0.0
    %2059 = vmatprep.subr.mxu0 0.0
    %2060 = vmatpush2.msra.mxu0 0.0
    %2061 = vmatprep.subr.mxu0 0.0
    %2062 = vmatpush2.msra.mxu0 0.0
    %2063 = vmatprep.subr.mxu0 0.0
    %2064 = vmatpush2.msra.mxu0 0.0
    %2065 = vmatprep.subr.mxu0 0.0
    %2066 = vmatpush2.msra.mxu0 0.0
    %2067 = vmatprep.subr.mxu0 0.0
    %2068 = vmatpush2.msra.mxu0 0.0
    %2069 = vmatprep.subr.mxu0 0.0
    %2070 = vmatpush2.msra.mxu0 0.0
    %2071 = vmatprep.subr.mxu0 0.0
    %2072 = vmatpush2.msra.mxu0 0.0
    %2073 = vmatprep.subr.mxu0 0.0
    %2074 = vmatpush2.msra.mxu0 0.0
    %2075 = vmatprep.subr.mxu0 0.0
    %2076 = vmatpush2.msra.mxu0 0.0
    %2077 = vmatprep.subr.mxu0 0.0
    %2078 = vmatpush2.msra.mxu0 0.0
    %2079 = vmatprep.subr.mxu0 0.0
    %2080 = vmatpush2.msra.mxu0 0.0
    %2081 = vmatprep.subr.mxu0 0.0
    %2082 = vmatpush2.msra.mxu0 0.0
    %2083 = vmatprep.mubr.f32.mxu0 0.0
    %2084 = vmatmul.mubr.f32.gmra.mxu0 %v1981
    %v2085 = vpop.f32.mrf.mxu0
    %v2086 = vpop.f32.mrf.mxu0
    %2087 = vmatprep.mubr.f32.mxu0 0.0
    %2088 = vmatmul.mubr.f32.gmra.mxu0 %v1984
    %v2089 = vpop.f32.mrf.mxu0
    %v2090 = vpop.f32.mrf.mxu0
    %2091 = vmatprep.mubr.f32.mxu0 0.0
    %2092 = vmatmul.mubr.f32.gmra.mxu0 %v1987
    %v2093 = vpop.f32.mrf.mxu0
    %v2094 = vpop.f32.mrf.mxu0
    %2095 = vmatprep.mubr.f32.mxu0 0.0
    %2096 = vmatmul.mubr.f32.gmra.mxu0 %v1990
    %v2097 = vpop.f32.mrf.mxu0
    %v2098 = vpop.f32.mrf.mxu0
    %2099 = vmatprep.mubr.f32.mxu0 0.0
    %2100 = vmatmul.mubr.f32.gmra.mxu0 %v1993
    %v2101 = vpop.f32.mrf.mxu0
    %v2102 = vadd.f32 0.0, %v2101
    %v2103 = vpop.f32.mrf.mxu0
    %2104 = vmatprep.mubr.f32.mxu0 0.0
    %2105 = vmatmul.mubr.f32.gmra.mxu0 %v1996
    %v2106 = vpop.f32.mrf.mxu0
    %v2107 = vadd.f32 0.0, %v2106
    %v2108 = vpop.f32.mrf.mxu0
    %2109 = vmatprep.mubr.f32.mxu0 0.0
    %2110 = vmatmul.mubr.f32.gmra.mxu0 %v1999
    %v2111 = vpop.f32.mrf.mxu0
    %v2112 = vadd.f32 0.0, %v2111
    %v2113 = vpop.f32.mrf.mxu0
    %2114 = vmatprep.mubr.f32.mxu0 0.0
    %2115 = vmatmul.mubr.f32.gmra.mxu0 %v2002
    %v2116 = vpop.f32.mrf.mxu0
    %v2117 = vadd.f32 0.0, %v2116
    %v2118 = vpop.f32.mrf.mxu0
    %2119 = vmatprep.mubr.f32.mxu0 0.0
    %2120 = vmatmul.mubr.f32.gmra.mxu0 %v2005
    %v2121 = vpop.f32.mrf.mxu0
    %v2122 = vadd.f32 0.0, %v2121
    %v2123 = vpop.f32.mrf.mxu0
    %2124 = vmatprep.mubr.f32.mxu0 0.0
    %2125 = vmatmul.mubr.f32.gmra.mxu0 %v2008
    %v2126 = vpop.f32.mrf.mxu0
    %v2127 = vadd.f32 0.0, %v2126
    %v2128 = vpop.f32.mrf.mxu0
    %2129 = vmatprep.mubr.f32.mxu0 0.0
    %2130 = vmatmul.mubr.f32.gmra.mxu0 %v2011
    %v2131 = vpop.f32.mrf.mxu0
    %v2132 = vadd.f32 0.0, %v2131
    %v2133 = vpop.f32.mrf.mxu0
    %2134 = vmatprep.mubr.f32.mxu0 0.0
    %2135 = vmatmul.mubr.f32.gmra.mxu0 %v2014
    %v2136 = vpop.f32.mrf.mxu0
    %v2137 = vadd.f32 0.0, %v2136
    %v2138 = vpop.f32.mrf.mxu0
    %2139 = vdwg.mxu0
    %v2140 = vmul.f32 %v2102, %v2102
    %v2141 = vmul.f32 %v2107, %v2107
    %v2142 = vmul.f32 %v2112, %v2112
    %v2143 = vmul.f32 %v2117, %v2117
    %v2144 = vmul.f32 %v2122, %v2122
    %v2145 = vmul.f32 %v2127, %v2127
    %v2146 = vmul.f32 %v2132, %v2132
    %v2147 = vmul.f32 %v2137, %v2137
    %v2148 = vsel %vm1333, %v2140, 0.0
    %v2149 = vsel %vm1333, %v2141, 0.0
    %v2150 = vadd.f32 %v2148, %v2149
    %v2151 = vsel %vm1333, %v2142, 0.0
    %v2152 = vadd.f32 %v2150, %v2151
    %v2153 = vsel %vm1333, %v2143, 0.0
    %v2154 = vadd.f32 %v2152, %v2153
    %2155 = vadd.xlane.f32.xlu0 %v2154
    %v2156 = vpop.xlane.xlu0 %2155
    %v2157 = vrot.slane %v2156, 4
    %v2158 = vadd.f32 %v2156, %v2157
    %v2159 = vrot.slane %v2158, 2
    %v2160 = vadd.f32 %v2158, %v2159
    %v2161 = vrot.slane %v2160, 1
    %v2162 = vadd.f32 %v2160, %v2161
    %s2163 = vtos %v2162
    %v2164 = vrcp.pop 1024.0
    %s2165 = vtos %v2164
    %s2166 = smul.f32 %s2163, %s2165
    %v2167 = vsel %vm1333, %v2144, 0.0
    %v2168 = vsel %vm1333, %v2145, 0.0
    %v2169 = vadd.f32 %v2167, %v2168
    %v2170 = vsel %vm1333, %v2146, 0.0
    %v2171 = vadd.f32 %v2169, %v2170
    %v2172 = vsel %vm1333, %v2147, 0.0
    %v2173 = vadd.f32 %v2171, %v2172
    %2174 = vadd.xlane.f32.xlu0 %v2173
    %v2175 = vpop.xlane.xlu0 %2174
    %v2176 = vrot.slane %v2175, 4
    %v2177 = vadd.f32 %v2175, %v2176
    %v2178 = vrot.slane %v2177, 2
    %v2179 = vadd.f32 %v2177, %v2178
    %v2180 = vrot.slane %v2179, 1
    %v2181 = vadd.f32 %v2179, %v2180
    %s2182 = vtos %v2181
    %v2183 = vrcp.pop 1024.0
    %s2184 = vtos %v2183
    %s2185 = smul.f32 %s2182, %s2184
    %s2186 = sadd.f32 %s2166, %s2185
    %2191 = vrot.lane.b32.xlu0 %v2144, 96
    %v2192 = vpop.permute.xlu0 %2191
    %2193 = vrot.lane.b32.xlu0 %v2145, 96
    %v2194 = vpop.permute.xlu0 %2193
    %2195 = vrot.lane.b32.xlu0 %v2146, 96
    %v2196 = vpop.permute.xlu0 %2195
    %2197 = vrot.lane.b32.xlu0 %v2147, 96
    %v2198 = vpop.permute.xlu0 %2197
    %v2203 = vsel %vm1333, %v2192, 0.0
    %v2204 = vsel %vm1333, %v2194, 0.0
    %v2205 = vadd.f32 %v2203, %v2204
    %v2206 = vsel %vm1333, %v2196, 0.0
    %v2207 = vadd.f32 %v2205, %v2206
    %v2208 = vsel %vm1333, %v2198, 0.0
    %v2209 = vadd.f32 %v2207, %v2208
    %2210 = vadd.xlane.f32.xlu0 %v2209
    %v2211 = vpop.xlane.xlu0 %2210
    %v2212 = vrot.slane %v2211, 4
    %v2213 = vadd.f32 %v2211, %v2212
    %v2214 = vrot.slane %v2213, 2
    %v2215 = vadd.f32 %v2213, %v2214
    %v2216 = vrot.slane %v2215, 1
    %v2217 = vadd.f32 %v2215, %v2216
    %s2218 = vtos %v2217
    %v2219 = vrcp.pop 1024.0
    %s2220 = vtos %v2219
    %s2221 = smul.f32 %s2218, %s2220
    %s2222 = sadd.f32 %s2186, %s2221
    %v2223 = vrcp.pop 3.0
    %s2224 = vtos %v2223
    %s2225 = smul.f32 %s2222, %s2224
    %s2226 = scalar_lea.smem [#allocation5], 0
    %2227 = sst [smem:[%s2226]] %s2225
    %v2228 = vrot.slane %v1436, 6
    %v2230 = vsel %vm1536, %v1372, %v2228
    %v2232 = vsel %vm1333, %v2230, 0
    %2234 = vmatprep.subr.mxu0 0.0
    %2235 = vmatpush1.xpose.msra.mxu0 0.0
    %2236 = vmatprep.subr.mxu0 0.0
    %2237 = vmatpush1.xpose.msra.mxu0 0.0
    %2238 = vmatprep.subr.mxu0 0.0
    %2239 = vmatpush1.xpose.msra.mxu0 0.0
    %2240 = vmatprep.subr.mxu0 0.0
    %2241 = vmatpush1.xpose.msra.mxu0 0.0
    %2242 = vmatprep.subr.mxu0 0.0
    %2243 = vmatpush1.xpose.msra.mxu0 0.0
    %2244 = vmatprep.subr.mxu0 0.0
    %2245 = vmatpush1.xpose.msra.mxu0 0.0
    %2246 = vmatprep.subr.mxu0 0.0
    %2247 = vmatpush1.xpose.msra.mxu0 0.0
    %2248 = vmatprep.subr.mxu0 0.0
    %2249 = vmatpush1.xpose.msra.mxu0 0.0
    %2250 = vmatprep.subr.mxu0 0.0
    %2251 = vmatpush1.xpose.msra.mxu0 0.0
    %2252 = vmatprep.subr.mxu0 0.0
    %2253 = vmatpush1.xpose.msra.mxu0 0.0
    %2254 = vmatprep.subr.mxu0 0.0
    %2255 = vmatpush1.xpose.msra.mxu0 0.0
    %2256 = vmatprep.subr.mxu0 0.0
    %2257 = vmatpush1.xpose.msra.mxu0 0.0
    %2258 = vmatprep.subr.mxu0 0.0
    %2259 = vmatpush1.xpose.msra.mxu0 0.0
    %2260 = vmatprep.subr.mxu0 0.0
    %2261 = vmatpush1.xpose.msra.mxu0 0.0
    %2262 = vmatprep.subr.mxu0 0.0
    %2263 = vmatpush1.xpose.msra.mxu0 0.0
    %2264 = vmatprep.subr.mxu0 0.0
    %2265 = vmatpush1.xpose.msra.mxu0 %v2232
    %2266 = vmatprep.subr.mxu0 0.0
    %2267 = vmatpush2.xpose.msra.mxu0 0.0
    %2268 = vmatprep.subr.mxu0 0.0
    %2269 = vmatpush2.xpose.msra.mxu0 0.0
    %2270 = vmatprep.subr.mxu0 0.0
    %2271 = vmatpush2.xpose.msra.mxu0 0.0
    %2272 = vmatprep.subr.mxu0 0.0
    %2273 = vmatpush2.xpose.msra.mxu0 0.0
    %2274 = vmatprep.subr.mxu0 0.0
    %2275 = vmatpush2.xpose.msra.mxu0 0.0
    %2276 = vmatprep.subr.mxu0 0.0
    %2277 = vmatpush2.xpose.msra.mxu0 0.0
    %2278 = vmatprep.subr.mxu0 0.0
    %2279 = vmatpush2.xpose.msra.mxu0 0.0
    %2280 = vmatprep.subr.mxu0 0.0
    %2281 = vmatpush2.xpose.msra.mxu0 0.0
    %2282 = vmatprep.subr.mxu0 0.0
    %2283 = vmatpush2.xpose.msra.mxu0 0.0
    %2284 = vmatprep.subr.mxu0 0.0
    %2285 = vmatpush2.xpose.msra.mxu0 0.0
    %2286 = vmatprep.subr.mxu0 0.0
    %2287 = vmatpush2.xpose.msra.mxu0 0.0
    %2288 = vmatprep.subr.mxu0 0.0
    %2289 = vmatpush2.xpose.msra.mxu0 0.0
    %2290 = vmatprep.subr.mxu0 0.0
    %2291 = vmatpush2.xpose.msra.mxu0 0.0
    %2292 = vmatprep.subr.mxu0 0.0
    %2293 = vmatpush2.xpose.msra.mxu0 0.0
    %2294 = vmatprep.subr.mxu0 0.0
    %2295 = vmatpush2.xpose.msra.mxu0 0.0
    %2296 = vmatprep.subr.mxu0 0.0
    %2297 = vmatpush2.xpose.msra.mxu0 0.0
    %2298 = vmatprep.mubr.f32.mxu0 0.0
    %2299 = vmatmul.mubr.f32.gmra.mxu0 %v2232
    %v2300 = vpop.f32.mrf.mxu0
    %v2301 = vadd.f32 0.0, %v2300
    %v2302 = vpop.f32.mrf.mxu0
    %2303 = vdwg.mxu0
    %v2304 = vlaneseq
    %v2305 = vshrl.u32 %v2304, 7
    %v2306 = vlaneseq
    %v2307 = vand.u32 %v2306, 127
    %vm2308 = vcmp.eq.s32.totalorder %v2305, %v2307
    %v2309 = vsel %vm2308, %v2301, 0.0
    %vm2310 = vcmask 27648
    %v2311 = vsel %vm2310, %v2309, 0.0
    %2312 = vadd.xlane.f32.xlu0 %v2311
    %v2313 = vpop.xlane.xlu0 %2312
    %v2314 = vrot.slane %v2311, 4
    %v2315 = vadd.f32 %v2311, %v2314
    %v2316 = vrot.slane %v2315, 2
    %v2317 = vadd.f32 %v2315, %v2316
    %v2318 = vrot.slane %v2317, 1
    %v2319 = vadd.f32 %v2317, %v2318
    %v2320 = vadd.f32 %v2313, %v2319
    %v2321 = vmul.f32 %v2301, 2.0
    %v2322 = vsub.f32 %v2320, %v2321
    %v2323 = vmax.f32 %v2322, 0.0
    %v2324 = vsel %vm2310, %v2323, 0.0
    %2325 = vadd.xlane.f32.xlu0 %v2324
    %v2326 = vpop.xlane.xlu0 %2325
    %v2327 = vrot.slane %v2326, 4
    %v2328 = vadd.f32 %v2326, %v2327
    %v2329 = vrot.slane %v2328, 2
    %v2330 = vadd.f32 %v2328, %v2329
    %v2331 = vrot.slane %v2330, 1
    %v2332 = vadd.f32 %v2330, %v2331
    %s2333 = vtos %v2332
    %v2334 = vrcp.pop 12.0
    %s2335 = vtos %v2334
    %s2336 = smul.f32 %s2333, %s2335
    %v2337 = vrcp.pop 4.0
    %s2338 = vtos %v2337
    %s2339 = smul.f32 %s2336, %s2338
    %v2340 = vsub.f32 0.0, %v2323
    %v2341 = vstv %s2339
    %v2342 = vrcp.pop %v2341
    %v2343 = vmul.f32 %v2340, %v2342
    %v2344 = vmul.f32 %v2343, 1.442695
    %v2345 = vpow.pop %v2344
    %v2346 = vadd.f32 %v2345, 0.0
    %s2347 = smul.f32 %s2339, 2.0
    %v2348 = vstv %s2347
    %v2349 = vrcp.pop %v2348
    %v2350 = vmul.f32 %v2340, %v2349
    %v2351 = vmul.f32 %v2350, 1.442695
    %v2352 = vpow.pop %v2351
    %v2353 = vadd.f32 %v2346, %v2352
    %s2354 = smul.f32 %s2339, 4.0
    %v2355 = vstv %s2354
    %v2356 = vrcp.pop %v2355
    %v2357 = vmul.f32 %v2340, %v2356
    %v2358 = vmul.f32 %v2357, 1.442695
    %v2359 = vpow.pop %v2358
    %v2360 = vadd.f32 %v2353, %v2359
    %s2361 = smul.f32 %s2339, 8.0
    %v2362 = vstv %s2361
    %v2363 = vrcp.pop %v2362
    %v2364 = vmul.f32 %v2340, %v2363
    %v2365 = vmul.f32 %v2364, 1.442695
    %v2366 = vpow.pop %v2365
    %v2367 = vadd.f32 %v2360, %v2366
    %s2368 = smul.f32 %s2339, 16.0
    %v2369 = vstv %s2368
    %v2370 = vrcp.pop %v2369
    %v2371 = vmul.f32 %v2340, %v2370
    %v2372 = vmul.f32 %v2371, 1.442695
    %v2373 = vpow.pop %v2372
    %v2374 = vadd.f32 %v2367, %v2373
    %v2375 = vsel %vm1848, %v2374, 0.0
    %2376 = vadd.xlane.f32.xlu0 %v2375
    %v2377 = vpop.xlane.xlu0 %2376
    %v2378 = vrot.slane %v2377, 4
    %v2379 = vadd.f32 %v2377, %v2378
    %v2380 = vrot.slane %v2379, 2
    %v2381 = vadd.f32 %v2379, %v2380
    %v2382 = vrot.slane %v2381, 1
    %v2383 = vadd.f32 %v2381, %v2382
    %s2384 = vtos %v2383
    %v2386 = vrot.slane %v2374, 2
    %2387 = vrot.lane.b32.xlu0 %v2386, 126
    %v2388 = vpop.permute.xlu0 %2387
    %v2390 = vsel %vm1848, %v2388, 0.0
    %2391 = vadd.xlane.f32.xlu0 %v2390
    %v2392 = vpop.xlane.xlu0 %2391
    %v2393 = vrot.slane %v2392, 4
    %v2394 = vadd.f32 %v2392, %v2393
    %v2395 = vrot.slane %v2394, 2
    %v2396 = vadd.f32 %v2394, %v2395
    %v2397 = vrot.slane %v2396, 1
    %v2398 = vadd.f32 %v2396, %v2397
    %s2399 = vtos %v2398
    %s2400 = sadd.f32 %s2384, %s2399
    %2401 = vrot.lane.b32.xlu0 %v2374, 126
    %v2402 = vpop.permute.xlu0 %2401
    %v2404 = vsel %vm1848, %v2402, 0.0
    %2405 = vadd.xlane.f32.xlu0 %v2404
    %v2406 = vpop.xlane.xlu0 %2405
    %v2407 = vrot.slane %v2406, 4
    %v2408 = vadd.f32 %v2406, %v2407
    %v2409 = vrot.slane %v2408, 2
    %v2410 = vadd.f32 %v2408, %v2409
    %v2411 = vrot.slane %v2410, 1
    %v2412 = vadd.f32 %v2410, %v2411
    %s2413 = vtos %v2412
    %s2414 = ssub.f32 %s2400, %s2413
    %v2416 = vsel %vm1848, %v2386, 0.0
    %2417 = vadd.xlane.f32.xlu0 %v2416
    %v2418 = vpop.xlane.xlu0 %2417
    %v2419 = vrot.slane %v2418, 4
    %v2420 = vadd.f32 %v2418, %v2419
    %v2421 = vrot.slane %v2420, 2
    %v2422 = vadd.f32 %v2420, %v2421
    %v2423 = vrot.slane %v2422, 1
    %v2424 = vadd.f32 %v2422, %v2423
    %s2425 = vtos %v2424
    %s2426 = ssub.f32 %s2414, %s2425
    %v2427 = vrcp.pop 4.0
    %s2428 = vtos %v2427
    %s2429 = smul.f32 %s2426, %s2428
    %s2430 = scalar_lea.smem [#allocation5], 1
    %2431 = sst [smem:[%s2430]] %s2429
    // Predicated region
    $region22: #{pallas_text_concat_vision.1} parent=1 // pred_check
      _
    $region23: #{pallas_text_concat_vision.1} parent=1 // pred_check_branch
      %2433 = sbr.rel (0) target = $region25
    $region24: #{pallas_text_concat_vision.1} parent=1 // pred_region
      %s2435 = ssub.s32 32, 32
      %2436 = vsyncadd [#allocation3], %s2435
      %s2438 = sshll.u32 [#allocation2], 4
      %s2439 = int_to_ptr.vmem [resolvable:$true] %s2438
      %2441 = dma.vmem_to_hbm [thread:$0]  %s2439, 32, %s5, [#allocation3]
    $region25: #{pallas_text_concat_vision.1} parent=1 // pred_fallthru
      _
    // Predicated region
    $region26: #{pallas_text_concat_vision.1} parent=1 // pred_check
      _
    $region27: #{pallas_text_concat_vision.1} parent=1 // pred_check_branch
      %2443 = sbr.rel (0) target = $region29
    $region28: #{pallas_text_concat_vision.1} parent=1 // pred_region
      %s2445 = ssub.s32 16, 16
      %2446 = vsyncadd [#allocation4], %s2445
      %s2448 = sshll.u32 %s6, 4
      %s2449 = int_to_ptr.vmem [resolvable:$true] %s2448
      %2451 = dma.smem_to_vmem [#allocation5], 16, %s2449, [#allocation4]
    $region29: #{pallas_text_concat_vision.1} parent=1 // pred_fallthru
      _
    // Predicated region
    $region30: #{pallas_text_concat_vision.1} parent=1 // pred_check
      _
    $region31: #{pallas_text_concat_vision.1} parent=1 // pred_check_branch
      %2453 = sbr.rel (0) target = $region33
    $region32: #{pallas_text_concat_vision.1} parent=1 // pred_region
      %2454 = dma.done [#allocation3], 32
    $region33: #{pallas_text_concat_vision.1} parent=1 // pred_fallthru
      _
    // Predicated region
    $region34: #{pallas_text_concat_vision.1} parent=1 // pred_check
      _
    $region35: #{pallas_text_concat_vision.1} parent=1 // pred_check_branch
      %2456 = sbr.rel (0) target = $region37
    $region36: #{pallas_text_concat_vision.1} parent=1 // pred_region
      %2457 = dma.done [#allocation4], 16
    $region37: #{pallas_text_concat_vision.1} parent=1 // pred_fallthru
      _
    %2458 = sfence
    %2459 = vsyncpa [#allocation3], 1
    %2460 = vsyncpa [#allocation4], 1

</llo_original>
